<compile_context>
chip_gen: v5e
topology: v5e:2x2
jax: 0.10.0
libtpu: 0.0.40
codegen_flags: <defaults>
</compile_context>

<pallas_src>
import jax
import jax.numpy as jnp
import numpy as np
from jax.experimental import pallas as pl
from jax.experimental.pallas import tpu as pltpu

LN_EPS = 1e-5      # nn.LayerNorm default eps
VEC_EPS = 1e-8     # GCPLayerNorm eps (vector branch)


def _round_up(x, m):
    return ((x + m - 1) // m) * m


def _gcp_layernorm_kernel(s_ref, v_ref, wb_ref, g_ref, s_out_ref, v_out_ref):
    # ---- scalar LayerNorm over last dim (one-pass variance, f32 math) ----
    s = s_ref[...].astype(jnp.float32)                       # [tn, Ds]
    mean = jnp.mean(s, axis=-1, keepdims=True)
    mean_sq = jnp.mean(s * s, axis=-1, keepdims=True)
    var = mean_sq - mean * mean
    inv_std = jax.lax.rsqrt(var + LN_EPS)
    w = wb_ref[0:1, :].astype(jnp.float32)                   # [1, Ds]
    b = wb_ref[1:2, :].astype(jnp.float32)                   # [1, Ds]
    s_out_ref[...] = ((s - mean) * inv_std * w + b).astype(s_out_ref.dtype)

    # ---- vector norm on lane-dense flattened layout [tn, Dv*3] ----
    v = v_ref[...].astype(jnp.float32)                       # [tn, Dv*3]
    vv = v * v
    # Per-channel squared norms: exact f32 matmul with a constant 0/1
    # group-sum matrix G[j, c] = 1 if j // 3 == c  ->  [tn, Dv].
    sq_chan = jnp.dot(vv, g_ref[...],
                      preferred_element_type=jnp.float32,
                      precision=jax.lax.Precision.HIGHEST)
    sq_chan = jnp.maximum(sq_chan, VEC_EPS)                   # clamp(min=eps)
    mean_chan = jnp.mean(sq_chan, axis=-1, keepdims=True)     # [tn, 1]
    inv_norm = jax.lax.rsqrt(mean_chan)                       # 1/sqrt(mean)
    v_out_ref[...] = (v * inv_norm).astype(v_out_ref.dtype)


def gcp_layernorm(s, v, weight, bias, *, tile_n=1024):
    """s: [N, Ds], v: [N, Dv, 3], weight/bias: [Ds]."""
    N, Ds = s.shape
    Nv, Dv, C = v.shape
    assert Nv == N and C == 3
    if N == 0:  # module returns input unchanged for empty batch
        return s, v

    # Lane-dense flatten of the vector features (free contiguous reshape).
    v_flat = v.reshape(N, Dv * C)

    # Large row tiles (mem-bound streaming); clamp to problem size, keep the
    # sublane dim a multiple of 8, pad N so every tile is full.
    tile_n = max(8, min(int(tile_n), _round_up(N, 8)))
    tile_n = _round_up(tile_n, 8)
    n_pad = _round_up(N, tile_n)
    if n_pad != N:
        s_in = jnp.pad(s, ((0, n_pad - N), (0, 0)))
        v_in = jnp.pad(v_flat, ((0, n_pad - N), (0, 0)))
    else:
        s_in, v_in = s, v_flat

    # Stacked affine params (single resident VMEM block).
    wb = jnp.stack([weight, bias]).astype(s.dtype)            # [2, Ds]
    # Constant group-sum matrix for the xyz reduction.
    g = jnp.asarray(
        (np.arange(Dv * C)[:, None] // C == np.arange(Dv)[None, :]),
        dtype=jnp.float32)                                    # [Dv*3, Dv]

    grid = (n_pad // tile_n,)
    itemsize = jnp.dtype(s.dtype).itemsize
    bytes_io = int(2 * (s_in.size + v_in.size) * itemsize
                   + wb.size * itemsize + g.size * 4)
    flops = int(n_pad * (10 * Ds + 6 * Dv * C + 2 * Dv * C * Dv))
    transcendentals = int(2 * n_pad)

    out_shapes = (
        jax.ShapeDtypeStruct((n_pad, Ds), s.dtype),
        jax.ShapeDtypeStruct((n_pad, Dv * C), v.dtype),
    )
    s_out, v_out = pl.pallas_call(
        _gcp_layernorm_kernel,
        out_shape=out_shapes,
        grid_spec=pltpu.PrefetchScalarGridSpec(
            num_scalar_prefetch=0,
            grid=grid,
            in_specs=[
                pl.BlockSpec((tile_n, Ds), lambda i: (i, 0)),
                pl.BlockSpec((tile_n, Dv * C), lambda i: (i, 0)),
                pl.BlockSpec((2, Ds), lambda i: (0, 0)),
                pl.BlockSpec((Dv * C, Dv), lambda i: (0, 0)),
            ],
            out_specs=[
                pl.BlockSpec((tile_n, Ds), lambda i: (i, 0)),
                pl.BlockSpec((tile_n, Dv * C), lambda i: (i, 0)),
            ],
        ),
        compiler_params=pltpu.CompilerParams(
            dimension_semantics=("parallel",),
        ),
        cost_estimate=pl.CostEstimate(
            flops=flops,
            transcendentals=transcendentals,
            bytes_accessed=bytes_io,
        ),
    )(s_in, v_in, wb, g)

    return s_out[:N], v_out[:N].reshape(N, Dv, C)


def _reference(s, v, weight, bias):
    s = s.astype(jnp.float32)
    mean = jnp.mean(s, axis=-1, keepdims=True)
    var = jnp.mean(jnp.square(s - mean), axis=-1, keepdims=True)
    s_out = (s - mean) / jnp.sqrt(var + LN_EPS) * weight + bias
    v = v.astype(jnp.float32)
    sq = jnp.maximum(jnp.sum(jnp.square(v), axis=-1, keepdims=True), VEC_EPS)
    vnorm = jnp.sqrt(jnp.mean(sq, axis=-2, keepdims=True))
    return s_out, v / vnorm


if __name__ == "__main__":
    # Small shapes consistent with GCPLayerNorm(dims=ScalarVector(32, 8)):
    #   N = 300 nodes (not tile-aligned -> exercises padding path),
    #   scalar_dims = 32, vector_dims = 8 (each vector channel is 3-D).
    N, Ds, Dv = 300, 32, 8
    key = jax.random.PRNGKey(0)
    k_s, k_v = jax.random.split(key)
    s = jax.random.normal(k_s, (N, Ds), dtype=jnp.float32)
    v = jax.random.normal(k_v, (N, Dv, 3), dtype=jnp.float32)

    # Deterministic, non-trivial affine params to exercise the weight/bias path.
    weight = 1.0 + 0.05 * jnp.arange(Ds, dtype=jnp.float32)
    bias = 0.01 * jnp.arange(Ds, dtype=jnp.float32)

    # tile_n=128 here so the small demo still runs a multi-step grid (3 tiles);
    # the default of 1024 is the recommended setting for realistic N.
    s_out, v_out = gcp_layernorm(s, v, weight, bias, tile_n=128)
    jax.block_until_ready((s_out, v_out))

    s_ref, v_ref = _reference(s, v, weight, bias)
    np.testing.assert_allclose(np.asarray(s_out), np.asarray(s_ref), rtol=1e-5, atol=1e-5)
    np.testing.assert_allclose(np.asarray(v_out), np.asarray(v_ref), rtol=1e-5, atol=1e-5)

    print("KERNEL_OK")
</pallas_src>

<mosaic_0001>
module attributes {stable_mosaic.version = 11 : i64} {
  func.func @_gcp_layernorm_kernel(%arg0: i32, %arg1: memref<128x32xf32, #tpu.memory_space<vmem>>, %arg2: memref<128x24xf32, #tpu.memory_space<vmem>>, %arg3: memref<2x32xf32, #tpu.memory_space<vmem>>, %arg4: memref<24x8xf32, #tpu.memory_space<vmem>>, %arg5: memref<128x32xf32, #tpu.memory_space<vmem>>, %arg6: memref<128x24xf32, #tpu.memory_space<vmem>>) attributes {dimension_semantics = [#tpu.dimension_semantics<parallel>], iteration_bounds = array<i64: 3>, scalar_prefetch = 0 : i64, scratch_operands = 0 : i64, tpu.core_type = #tpu.core_type<tc>, window_params = [{transform_indices = @transform_0, window_bounds = array<i64: 128, 32>}, {transform_indices = @transform_1, window_bounds = array<i64: 128, 24>}, {pipeline_mode = #tpu.pipeline_mode<synchronous>, transform_indices = @transform_2, window_bounds = array<i64: 2, 32>}, {pipeline_mode = #tpu.pipeline_mode<synchronous>, transform_indices = @transform_3, window_bounds = array<i64: 24, 8>}, {transform_indices = @transform_4, window_bounds = array<i64: 128, 32>}, {transform_indices = @transform_5, window_bounds = array<i64: 128, 24>}]} {
    %c0 = arith.constant 0 : index
    %c0_0 = arith.constant 0 : index
    %0 = vector.load %arg1[%c0, %c0_0] : memref<128x32xf32, #tpu.memory_space<vmem>>, vector<128x32xf32>
    %cst = arith.constant dense<0.000000e+00> : vector<128xf32>
    %1 = vector.multi_reduction <add>, %0, %cst [1] : vector<128x32xf32> to vector<128xf32>
    %2 = vector.shape_cast %1 : vector<128xf32> to vector<128x1xf32>
    %cst_1 = arith.constant 3.200000e+01 : f32
    %3 = vector.broadcast %cst_1 : f32 to vector<128x1xf32>
    %4 = arith.divf %2, %3 : vector<128x1xf32>
    %5 = arith.mulf %0, %0 : vector<128x32xf32>
    %cst_2 = arith.constant dense<0.000000e+00> : vector<128xf32>
    %6 = vector.multi_reduction <add>, %5, %cst_2 [1] : vector<128x32xf32> to vector<128xf32>
    %7 = vector.shape_cast %6 : vector<128xf32> to vector<128x1xf32>
    %cst_3 = arith.constant 3.200000e+01 : f32
    %8 = vector.broadcast %cst_3 : f32 to vector<128x1xf32>
    %9 = arith.divf %7, %8 : vector<128x1xf32>
    %10 = arith.mulf %4, %4 : vector<128x1xf32>
    %11 = arith.subf %9, %10 : vector<128x1xf32>
    %cst_4 = arith.constant 9.99999974E-6 : f32
    %12 = vector.broadcast %cst_4 : f32 to vector<128x1xf32>
    %13 = arith.addf %11, %12 : vector<128x1xf32>
    %14 = math.rsqrt %13 : vector<128x1xf32>
    %c0_5 = arith.constant 0 : index
    %c0_6 = arith.constant 0 : index
    %15 = vector.load %arg3[%c0_5, %c0_6] : memref<2x32xf32, #tpu.memory_space<vmem>>, vector<1x32xf32>
    %c1 = arith.constant 1 : index
    %c0_7 = arith.constant 0 : index
    %16 = vector.load %arg3[%c1, %c0_7] : memref<2x32xf32, #tpu.memory_space<vmem>>, vector<1x32xf32>
    %17 = vector.broadcast %4 : vector<128x1xf32> to vector<128x32xf32>
    %18 = arith.subf %0, %17 : vector<128x32xf32>
    %19 = vector.broadcast %14 : vector<128x1xf32> to vector<128x32xf32>
    %20 = arith.mulf %18, %19 : vector<128x32xf32>
    %21 = vector.broadcast %15 : vector<1x32xf32> to vector<128x32xf32>
    %22 = arith.mulf %20, %21 : vector<128x32xf32>
    %23 = vector.broadcast %16 : vector<1x32xf32> to vector<128x32xf32>
    %24 = arith.addf %22, %23 : vector<128x32xf32>
    %c0_8 = arith.constant 0 : index
    %c0_9 = arith.constant 0 : index
    %25 = vector.load %arg5[%c0_8, %c0_9] : memref<128x32xf32, #tpu.memory_space<vmem>>, vector<128x32xf32>
    tpu.vector_store %arg5[%c0_8, %c0_9], %24 {strides = array<i32>} : memref<128x32xf32, #tpu.memory_space<vmem>>, vector<128x32xf32>,
    %c0_10 = arith.constant 0 : index
    %c0_11 = arith.constant 0 : index
    %26 = vector.load %arg2[%c0_10, %c0_11] : memref<128x24xf32, #tpu.memory_space<vmem>>, vector<128x24xf32>
    %27 = arith.mulf %26, %26 : vector<128x24xf32>
    %c0_12 = arith.constant 0 : index
    %c0_13 = arith.constant 0 : index
    %28 = vector.load %arg4[%c0_12, %c0_13] : memref<24x8xf32, #tpu.memory_space<vmem>>, vector<24x8xf32>
    %cst_14 = arith.constant dense<0.000000e+00> : vector<128x8xf32>
    %29 = tpu.matmul %27, %28, %cst_14 {dimension_numbers = #tpu.dot_dimension_numbers<[1], [0], [0], [1], [0, 0, 1, 1], [], []>, precision = #tpu.contract_precision<fp32>} : vector<128x24xf32>, vector<24x8xf32>, vector<128x8xf32> -> vector<128x8xf32>
    %cst_15 = arith.constant 9.99999993E-9 : f32
    %30 = vector.broadcast %cst_15 : f32 to vector<128x8xf32>
    %31 = arith.maximumf %29, %30 : vector<128x8xf32>
    %cst_16 = arith.constant dense<0.000000e+00> : vector<128xf32>
    %32 = vector.multi_reduction <add>, %31, %cst_16 [1] : vector<128x8xf32> to vector<128xf32>
    %33 = vector.shape_cast %32 : vector<128xf32> to vector<128x1xf32>
    %cst_17 = arith.constant 8.000000e+00 : f32
    %34 = vector.broadcast %cst_17 : f32 to vector<128x1xf32>
    %35 = arith.divf %33, %34 : vector<128x1xf32>
    %36 = math.rsqrt %35 : vector<128x1xf32>
    %37 = vector.broadcast %36 : vector<128x1xf32> to vector<128x24xf32>
    %38 = arith.mulf %26, %37 : vector<128x24xf32>
    %c0_18 = arith.constant 0 : index
    %c0_19 = arith.constant 0 : index
    %39 = vector.load %arg6[%c0_18, %c0_19] : memref<128x24xf32, #tpu.memory_space<vmem>>, vector<128x24xf32>
    tpu.vector_store %arg6[%c0_18, %c0_19], %38 {strides = array<i32>} : memref<128x24xf32, #tpu.memory_space<vmem>>, vector<128x24xf32>,
    return
  }
  func.func @transform_0(%arg0: i32) -> (i32, i32) {
    %c0_i32 = arith.constant 0 : i32
    %c0_i32_0 = arith.constant 0 : i32
    return %arg0, %c0_i32 : i32, i32
  }
  func.func @transform_1(%arg0: i32) -> (i32, i32) {
    %c0_i32 = arith.constant 0 : i32
    %c0_i32_0 = arith.constant 0 : i32
    return %arg0, %c0_i32 : i32, i32
  }
  func.func @transform_2(%arg0: i32) -> (i32, i32) {
    %c0_i32 = arith.constant 0 : i32
    %c0_i32_0 = arith.constant 0 : i32
    %c0_i32_1 = arith.constant 0 : i32
    return %c0_i32, %c0_i32_0 : i32, i32
  }
  func.func @transform_3(%arg0: i32) -> (i32, i32) {
    %c0_i32 = arith.constant 0 : i32
    %c0_i32_0 = arith.constant 0 : i32
    %c0_i32_1 = arith.constant 0 : i32
    return %c0_i32, %c0_i32_0 : i32, i32
  }
  func.func @transform_4(%arg0: i32) -> (i32, i32) {
    %c0_i32 = arith.constant 0 : i32
    %c0_i32_0 = arith.constant 0 : i32
    return %arg0, %c0_i32 : i32, i32
  }
  func.func @transform_5(%arg0: i32) -> (i32, i32) {
    %c0_i32 = arith.constant 0 : i32
    %c0_i32_0 = arith.constant 0 : i32
    return %arg0, %c0_i32 : i32, i32
  }
}

</mosaic_0001>

<llo_original>
// kernel: tpu_custom_call.1
$region0: #{tpu_custom_call.1}
  #allocation0 [shape = 'u32[]', space=smem, size = 0x4, offset = 0x4, fixed_abs, tag = 'smem constant byte address 0x4 - core index']
  #allocation1 [shape = 'u32[72,128]{1,0:T(1,128)}', space=vmem, size = 0x9000, scoped, tag = 'internal scratch']
  %s0 = inlined_call_operand.vmem [shape: f32[384,32], index: 0, kind: input, shape index: {}]
  %s1 = inlined_call_operand.vmem [shape: f32[384,24], index: 1, kind: input, shape index: {}]
  %s2 = inlined_call_operand.vmem [shape: f32[2,32], index: 2, kind: input, shape index: {}]
  %s3 = inlined_call_operand.vmem [shape: f32[24,8], index: 3, kind: input, shape index: {}]
  %s4 = inlined_call_operand.vmem [shape: f32[384,32], index: 4, kind: output, shape index: {0}]
  %s5 = inlined_call_operand.vmem [shape: f32[384,24], index: 5, kind: output, shape index: {1}]
  %6 = xla_tuple %s4, %s5
  %s7 = sld [smem:[#allocation0]]
  $region57: #{tpu_custom_call.1} parent=0
    _
  %s9 = ssub.s32 1, %s7
  %s10 = scalar_select 0, %s9, %s7
  loop: start=0, step=1, limit=5
  $region2: #{tpu_custom_call.1} parent=0 // loop_pre_header
    _
  $region3: #{tpu_custom_call.1} parent=0 // loop_header
    %s12 = sphi 0, %s16
    %p13 = scmp.ge.s32.totalorder %s12, 5
    %s22 = sphi 0, %s24
    %s25 = sphi 0, %s22
    %s26 = sphi 0, %s25
    %s42 = sphi 0, %s26
    %s48 = sphi 0, %s50
    %s51 = sphi 0, %s48
    %s52 = sphi 0, %s51
    %s68 = sphi 0, %s52
    %s72 = sphi 0, %s72
    %s74 = sphi 0, %s72
    %s75 = sphi 0, %s74
    %s89 = sphi 0, %s75
    %s93 = sphi 0, %s93
    %s95 = sphi 0, %s93
    %s96 = sphi 0, %s95
    %s110 = sphi 0, %s96
    %s116 = sphi 0, %s118
    %s119 = sphi 0, %s116
    %s120 = sphi 0, %s119
    %s136 = sphi 0, %s120
    %s142 = sphi 0, %s144
    %s145 = sphi 0, %s142
    %s146 = sphi 0, %s145
    %s162 = sphi 0, %s146
  $region4: #{tpu_custom_call.1} parent=0 // loop_header_branch
    %15 = sbr.rel (%p13) target = $region8
  $region5: #{tpu_custom_call.1} parent=0 // loop_body
    %s17 = ssub.s32 %s12, 1
    %s18 = ssub.s32 %s12, 2
    %s19 = sadd.s32 %s12, 1
    %s20 = ssub.s32 %s12, %s19
    %p21 = scmp.eq.s32.totalorder %s20, 0
    %s23 = sadd.s32 %s22, 1
    %s24 = scalar_select %p21, %s22, %s23
    %p27 = pneg %p21
    %p28 = scmp.eq.s32.totalorder %s12, 2
    %p29 = por %p27, %p28
    %p30 = scmp.ne.s32.totalorder %s22, %s25
    %p31 = scmp.eq.s32.totalorder %s12, 0
    %p32 = por %p30, %p31
    %p33 = scmp.ne.s32.totalorder %s22, %s25
    %p34 = scmp.eq.s32.totalorder %s17, 2
    %p35 = por %p33, %p34
    %p36 = scmp.ne.s32.totalorder %s25, %s26
    %p37 = scmp.eq.s32.totalorder %s17, 0
    %p38 = por %p36, %p37
    %p39 = scmp.ne.s32.totalorder %s25, %s26
    %p40 = scmp.eq.s32.totalorder %s18, 2
    %p41 = por %p39, %p40
    %p43 = scmp.ne.s32.totalorder %s26, %s42
    %p44 = scmp.eq.s32.totalorder %s18, 0
    %p45 = por %p43, %p44
    %s46 = ssub.s32 %s12, %s19
    %p47 = scmp.eq.s32.totalorder %s46, 0
    %s49 = sadd.s32 %s48, 1
    %s50 = scalar_select %p47, %s48, %s49
    %p53 = pneg %p47
    %p54 = scmp.eq.s32.totalorder %s12, 2
    %p55 = por %p53, %p54
    %p56 = scmp.ne.s32.totalorder %s48, %s51
    %p57 = scmp.eq.s32.totalorder %s12, 0
    %p58 = por %p56, %p57
    %p59 = scmp.ne.s32.totalorder %s48, %s51
    %p60 = scmp.eq.s32.totalorder %s17, 2
    %p61 = por %p59, %p60
    %p62 = scmp.ne.s32.totalorder %s51, %s52
    %p63 = scmp.eq.s32.totalorder %s17, 0
    %p64 = por %p62, %p63
    %p65 = scmp.ne.s32.totalorder %s51, %s52
    %p66 = scmp.eq.s32.totalorder %s18, 2
    %p67 = por %p65, %p66
    %p69 = scmp.ne.s32.totalorder %s52, %s68
    %p70 = scmp.eq.s32.totalorder %s18, 0
    %p71 = por %p69, %p70
    %s73 = sadd.s32 %s72, 1
    %p76 = scmp.eq.s32.totalorder %s12, 2
    %p77 = scmp.ne.s32.totalorder %s72, %s74
    %p78 = scmp.eq.s32.totalorder %s12, 0
    %p79 = por %p77, %p78
    %p80 = scmp.ne.s32.totalorder %s72, %s74
    %p81 = scmp.eq.s32.totalorder %s17, 2
    %p82 = por %p80, %p81
    %p83 = scmp.ne.s32.totalorder %s74, %s75
    %p84 = scmp.eq.s32.totalorder %s17, 0
    %p85 = por %p83, %p84
    %p86 = scmp.ne.s32.totalorder %s74, %s75
    %p87 = scmp.eq.s32.totalorder %s18, 2
    %p88 = por %p86, %p87
    %p90 = scmp.ne.s32.totalorder %s75, %s89
    %p91 = scmp.eq.s32.totalorder %s18, 0
    %p92 = por %p90, %p91
    %s94 = sadd.s32 %s93, 1
    %p97 = scmp.eq.s32.totalorder %s12, 2
    %p98 = scmp.ne.s32.totalorder %s93, %s95
    %p99 = scmp.eq.s32.totalorder %s12, 0
    %p100 = por %p98, %p99
    %p101 = scmp.ne.s32.totalorder %s93, %s95
    %p102 = scmp.eq.s32.totalorder %s17, 2
    %p103 = por %p101, %p102
    %p104 = scmp.ne.s32.totalorder %s95, %s96
    %p105 = scmp.eq.s32.totalorder %s17, 0
    %p106 = por %p104, %p105
    %p107 = scmp.ne.s32.totalorder %s95, %s96
    %p108 = scmp.eq.s32.totalorder %s18, 2
    %p109 = por %p107, %p108
    %p111 = scmp.ne.s32.totalorder %s96, %s110
    %p112 = scmp.eq.s32.totalorder %s18, 0
    %p113 = por %p111, %p112
    %s114 = ssub.s32 %s12, %s19
    %p115 = scmp.eq.s32.totalorder %s114, 0
    %s117 = sadd.s32 %s116, 1
    %s118 = scalar_select %p115, %s116, %s117
    %p121 = pneg %p115
    %p122 = scmp.eq.s32.totalorder %s12, 2
    %p123 = por %p121, %p122
    %p124 = scmp.ne.s32.totalorder %s116, %s119
    %p125 = scmp.eq.s32.totalorder %s12, 0
    %p126 = por %p124, %p125
    %p127 = scmp.ne.s32.totalorder %s116, %s119
    %p128 = scmp.eq.s32.totalorder %s17, 2
    %p129 = por %p127, %p128
    %p130 = scmp.ne.s32.totalorder %s119, %s120
    %p131 = scmp.eq.s32.totalorder %s17, 0
    %p132 = por %p130, %p131
    %p133 = scmp.ne.s32.totalorder %s119, %s120
    %p134 = scmp.eq.s32.totalorder %s18, 2
    %p135 = por %p133, %p134
    %p137 = scmp.ne.s32.totalorder %s120, %s136
    %p138 = scmp.eq.s32.totalorder %s18, 0
    %p139 = por %p137, %p138
    %s140 = ssub.s32 %s12, %s19
    %p141 = scmp.eq.s32.totalorder %s140, 0
    %s143 = sadd.s32 %s142, 1
    %s144 = scalar_select %p141, %s142, %s143
    %p147 = pneg %p141
    %p148 = scmp.eq.s32.totalorder %s12, 2
    %p149 = por %p147, %p148
    %p150 = scmp.ne.s32.totalorder %s142, %s145
    %p151 = scmp.eq.s32.totalorder %s12, 0
    %p152 = por %p150, %p151
    %p153 = scmp.ne.s32.totalorder %s142, %s145
    %p154 = scmp.eq.s32.totalorder %s17, 2
    %p155 = por %p153, %p154
    %p156 = scmp.ne.s32.totalorder %s145, %s146
    %p157 = scmp.eq.s32.totalorder %s17, 0
    %p158 = por %p156, %p157
    %p159 = scmp.ne.s32.totalorder %s145, %s146
    %p160 = scmp.eq.s32.totalorder %s18, 2
    %p161 = por %p159, %p160
    %p163 = scmp.ne.s32.totalorder %s146, %s162
    %p164 = scmp.eq.s32.totalorder %s18, 0
    %p165 = por %p163, %p164
    %p166 = scmp.le.s32.totalorder 1, %s12
    %p167 = scmp.lt.s32.totalorder %s12, 4
    %p168 = pnand %p166, %p167
    %p169 = pneg %p168
    // Predicated region
    $region9: #{tpu_custom_call.1} parent=5 // pred_check
      _
    $region10: #{tpu_custom_call.1} parent=5 // pred_check_branch
      %171 = sbr.rel (%p168) target = $region12
    $region11: #{tpu_custom_call.1} parent=5 // pred_region
      %s172 = ssub.s32 %s12, 1
      // Predicated region
      $region13: #{tpu_custom_call.1} parent=11 // pred_check
        %p173 = pneg %p85
      $region14: #{tpu_custom_call.1} parent=11 // pred_check_branch
        %175 = sbr.rel (%p173) target = $region16
      $region15: #{tpu_custom_call.1} parent=11 // pred_region
        _
      $region16: #{tpu_custom_call.1} parent=11 // pred_fallthru
        _
      // Predicated region
      $region17: #{tpu_custom_call.1} parent=11 // pred_check
        %p176 = pneg %p106
      $region18: #{tpu_custom_call.1} parent=11 // pred_check_branch
        %178 = sbr.rel (%p176) target = $region20
      $region19: #{tpu_custom_call.1} parent=11 // pred_region
        _
      $region20: #{tpu_custom_call.1} parent=11 // pred_fallthru
        _
    $region12: #{tpu_custom_call.1} parent=5 // pred_fallthru
      _
    %p179 = scmp.lt.s32.totalorder %s12, 3
    // Predicated region
    $region21: #{tpu_custom_call.1} parent=5 // pred_check
      %p180 = pneg %p179
    $region22: #{tpu_custom_call.1} parent=5 // pred_check_branch
      %182 = sbr.rel (%p180) target = $region24
    $region23: #{tpu_custom_call.1} parent=5 // pred_region
      // Predicated region
      $region25: #{tpu_custom_call.1} parent=23 // pred_check
        %p183 = pneg %p32
      $region26: #{tpu_custom_call.1} parent=23 // pred_check_branch
        %185 = sbr.rel (%p183) target = $region28
      $region27: #{tpu_custom_call.1} parent=23 // pred_region
        %s186 = smul.u32 16, %s12
        %p187 = scmp.lt.s32.totalorder %s186, 47
        %s188 = scalar_select %p187, %s186, 47
        %s189 = smul.addr %s188, 8
        %s190 = scalar_lea.vmem %s0, %s189
        %s191 = smul.u32 16, %s12
      $region28: #{tpu_custom_call.1} parent=23 // pred_fallthru
        _
      // Predicated region
      $region29: #{tpu_custom_call.1} parent=23 // pred_check
        %p192 = pneg %p58
      $region30: #{tpu_custom_call.1} parent=23 // pred_check_branch
        %194 = sbr.rel (%p192) target = $region32
      $region31: #{tpu_custom_call.1} parent=23 // pred_region
        %s195 = smul.u32 16, %s12
        %p196 = scmp.lt.s32.totalorder %s195, 47
        %s197 = scalar_select %p196, %s195, 47
        %s198 = smul.addr %s197, 8
        %s199 = scalar_lea.vmem %s1, %s198
        %s200 = smul.u32 16, %s12
      $region32: #{tpu_custom_call.1} parent=23 // pred_fallthru
        _
    $region24: #{tpu_custom_call.1} parent=5 // pred_fallthru
      _
    %p201 = scmp.le.s32.totalorder 1, %s12
    %p202 = scmp.lt.s32.totalorder %s12, 4
    %p203 = pnand %p201, %p202
    %p204 = pneg %p203
    // Predicated region
    $region33: #{tpu_custom_call.1} parent=5 // pred_check
      _
    $region34: #{tpu_custom_call.1} parent=5 // pred_check_branch
      %206 = sbr.rel (%p203) target = $region36
    $region35: #{tpu_custom_call.1} parent=5 // pred_region
      %s207 = ssub.s32 %s12, 1
      %s208 = smul.u32 16, %s17
      %p209 = scmp.lt.s32.totalorder %s208, 47
      %s210 = scalar_select %p209, %s208, 47
      %s211 = smul.addr %s210, 8
      %s212 = scalar_lea.vmem %s0, %s211
      %p213 = pneg %p38
      %p214 = pneg %p35
      %s215 = smul.u32 16, %s17
      %p216 = scmp.lt.s32.totalorder %s215, 47
      %s217 = scalar_select %p216, %s215, 47
      %s218 = smul.addr %s217, 8
      %s219 = scalar_lea.vmem %s1, %s218
      %p220 = pneg %p64
      %p221 = pneg %p61
      %p222 = pneg %p85
      %p223 = pneg %p82
      %p224 = pneg %p106
      %p225 = pneg %p103
      %p226 = pneg %p132
      %p227 = pneg %p129
      %s228 = smul.u32 16, %s17
      %p229 = scmp.lt.s32.totalorder %s228, 47
      %s230 = scalar_select %p229, %s228, 47
      %s231 = smul.addr %s230, 8
      %s232 = scalar_lea.vmem %s4, %s231
      %p233 = pneg %p158
      %p234 = pneg %p155
      %s235 = smul.u32 16, %s17
      %p236 = scmp.lt.s32.totalorder %s235, 47
      %s237 = scalar_select %p236, %s235, 47
      %s238 = smul.addr %s237, 8
      %s239 = scalar_lea.vmem %s5, %s238
      %s240 = smul.u32 16, %s17
      %p241 = scmp.lt.s32.totalorder %s240, 47
      %s242 = scalar_select %p241, %s240, 47
      %s243 = smul.addr %s242, 8
      %s244 = scalar_lea.vmem %s0, %s243
      %s245 = smul.u32 16, %s17
      %s246 = smul.u32 16, %s17
      %p247 = scmp.lt.s32.totalorder %s246, 47
      %s248 = scalar_select %p247, %s246, 47
      %s249 = smul.addr %s248, 8
      %s250 = scalar_lea.vmem %s1, %s249
      %s251 = smul.u32 16, %s17
      %s252 = smul.u32 16, %s17
      %p253 = scmp.lt.s32.totalorder %s252, 47
      %s254 = scalar_select %p253, %s252, 47
      %s255 = smul.addr %s254, 8
      %s256 = scalar_lea.vmem %s4, %s255
      %s257 = smul.u32 16, %s17
      %s258 = smul.u32 16, %s17
      %p259 = scmp.lt.s32.totalorder %s258, 47
      %s260 = scalar_select %p259, %s258, 47
      %s261 = smul.addr %s260, 8
      %s262 = scalar_lea.vmem %s5, %s261
      %s263 = smul.u32 16, %s17
      %v264 = vld [vmem:[%s244] sm:$0xff]
      %v265 = vld [vmem:[%s244 + $0x8] sm:$0xff]
      %v266 = vld [vmem:[%s244 + $0x10] sm:$0xff]
      %v267 = vld [vmem:[%s244 + $0x18] sm:$0xff]
      %v268 = vld [vmem:[%s244 + $0x20] sm:$0xff]
      %v269 = vld [vmem:[%s244 + $0x28] sm:$0xff]
      %v270 = vld [vmem:[%s244 + $0x30] sm:$0xff]
      %v271 = vld [vmem:[%s244 + $0x38] sm:$0xff]
      %v272 = vld [vmem:[%s244 + $0x40] sm:$0xff]
      %v273 = vld [vmem:[%s244 + $0x48] sm:$0xff]
      %v274 = vld [vmem:[%s244 + $0x50] sm:$0xff]
      %v275 = vld [vmem:[%s244 + $0x58] sm:$0xff]
      %v276 = vld [vmem:[%s244 + $0x60] sm:$0xff]
      %v277 = vld [vmem:[%s244 + $0x68] sm:$0xff]
      %v278 = vld [vmem:[%s244 + $0x70] sm:$0xff]
      %v279 = vld [vmem:[%s244 + $0x78] sm:$0xff]
      %vm280 = vcmask 261120
      %v281 = vsel %vm280, %v264, 0.0
      %282 = vadd.xlane.f32.xlu0 %v281
      %v283 = vpop.xlane.xlu0 %282
      %v284 = vsel %vm280, %v265, 0.0
      %285 = vadd.xlane.f32.xlu0 %v284
      %v286 = vpop.xlane.xlu0 %285
      %v287 = vsel %vm280, %v266, 0.0
      %288 = vadd.xlane.f32.xlu0 %v287
      %v289 = vpop.xlane.xlu0 %288
      %v290 = vsel %vm280, %v267, 0.0
      %291 = vadd.xlane.f32.xlu0 %v290
      %v292 = vpop.xlane.xlu0 %291
      %v293 = vsel %vm280, %v268, 0.0
      %294 = vadd.xlane.f32.xlu0 %v293
      %v295 = vpop.xlane.xlu0 %294
      %v296 = vsel %vm280, %v269, 0.0
      %297 = vadd.xlane.f32.xlu0 %v296
      %v298 = vpop.xlane.xlu0 %297
      %v299 = vsel %vm280, %v270, 0.0
      %300 = vadd.xlane.f32.xlu0 %v299
      %v301 = vpop.xlane.xlu0 %300
      %v302 = vsel %vm280, %v271, 0.0
      %303 = vadd.xlane.f32.xlu0 %v302
      %v304 = vpop.xlane.xlu0 %303
      %v305 = vsel %vm280, %v272, 0.0
      %306 = vadd.xlane.f32.xlu0 %v305
      %v307 = vpop.xlane.xlu0 %306
      %v308 = vsel %vm280, %v273, 0.0
      %309 = vadd.xlane.f32.xlu0 %v308
      %v310 = vpop.xlane.xlu0 %309
      %v311 = vsel %vm280, %v274, 0.0
      %312 = vadd.xlane.f32.xlu0 %v311
      %v313 = vpop.xlane.xlu0 %312
      %v314 = vsel %vm280, %v275, 0.0
      %315 = vadd.xlane.f32.xlu0 %v314
      %v316 = vpop.xlane.xlu0 %315
      %v317 = vsel %vm280, %v276, 0.0
      %318 = vadd.xlane.f32.xlu0 %v317
      %v319 = vpop.xlane.xlu0 %318
      %v320 = vsel %vm280, %v277, 0.0
      %321 = vadd.xlane.f32.xlu0 %v320
      %v322 = vpop.xlane.xlu0 %321
      %v323 = vsel %vm280, %v278, 0.0
      %324 = vadd.xlane.f32.xlu0 %v323
      %v325 = vpop.xlane.xlu0 %324
      %v326 = vsel %vm280, %v279, 0.0
      %327 = vadd.xlane.f32.xlu0 %v326
      %v328 = vpop.xlane.xlu0 %327
      %v329 = vrcp.pop 32.0
      %v330 = vmul.f32 32.0, %v329
      %v331 = vsub.f32 1.0, %v330
      %v332 = vmul.f32 %v329, %v331
      %v333 = vadd.f32 %v329, %v332
      %vm334 = vweird.f32 %v329
      %v335 = vsel %vm334, %v329, %v333
      %v336 = vmul.f32 %v283, %v335
      %v337 = vmul.f32 %v286, %v335
      %v338 = vmul.f32 %v289, %v335
      %v339 = vmul.f32 %v292, %v335
      %v340 = vmul.f32 %v295, %v335
      %v341 = vmul.f32 %v298, %v335
      %v342 = vmul.f32 %v301, %v335
      %v343 = vmul.f32 %v304, %v335
      %v344 = vmul.f32 %v307, %v335
      %v345 = vmul.f32 %v310, %v335
      %v346 = vmul.f32 %v313, %v335
      %v347 = vmul.f32 %v316, %v335
      %v348 = vmul.f32 %v319, %v335
      %v349 = vmul.f32 %v322, %v335
      %v350 = vmul.f32 %v325, %v335
      %v351 = vmul.f32 %v328, %v335
      %v352 = vmul.f32 %v264, %v264
      %v353 = vmul.f32 %v265, %v265
      %v354 = vmul.f32 %v266, %v266
      %v355 = vmul.f32 %v267, %v267
      %v356 = vmul.f32 %v268, %v268
      %v357 = vmul.f32 %v269, %v269
      %v358 = vmul.f32 %v270, %v270
      %v359 = vmul.f32 %v271, %v271
      %v360 = vmul.f32 %v272, %v272
      %v361 = vmul.f32 %v273, %v273
      %v362 = vmul.f32 %v274, %v274
      %v363 = vmul.f32 %v275, %v275
      %v364 = vmul.f32 %v276, %v276
      %v365 = vmul.f32 %v277, %v277
      %v366 = vmul.f32 %v278, %v278
      %v367 = vmul.f32 %v279, %v279
      %v368 = vsel %vm280, %v352, 0.0
      %369 = vadd.xlane.f32.xlu0 %v368
      %v370 = vpop.xlane.xlu0 %369
      %v371 = vsel %vm280, %v353, 0.0
      %372 = vadd.xlane.f32.xlu0 %v371
      %v373 = vpop.xlane.xlu0 %372
      %v374 = vsel %vm280, %v354, 0.0
      %375 = vadd.xlane.f32.xlu0 %v374
      %v376 = vpop.xlane.xlu0 %375
      %v377 = vsel %vm280, %v355, 0.0
      %378 = vadd.xlane.f32.xlu0 %v377
      %v379 = vpop.xlane.xlu0 %378
      %v380 = vsel %vm280, %v356, 0.0
      %381 = vadd.xlane.f32.xlu0 %v380
      %v382 = vpop.xlane.xlu0 %381
      %v383 = vsel %vm280, %v357, 0.0
      %384 = vadd.xlane.f32.xlu0 %v383
      %v385 = vpop.xlane.xlu0 %384
      %v386 = vsel %vm280, %v358, 0.0
      %387 = vadd.xlane.f32.xlu0 %v386
      %v388 = vpop.xlane.xlu0 %387
      %v389 = vsel %vm280, %v359, 0.0
      %390 = vadd.xlane.f32.xlu0 %v389
      %v391 = vpop.xlane.xlu0 %390
      %v392 = vsel %vm280, %v360, 0.0
      %393 = vadd.xlane.f32.xlu0 %v392
      %v394 = vpop.xlane.xlu0 %393
      %v395 = vsel %vm280, %v361, 0.0
      %396 = vadd.xlane.f32.xlu0 %v395
      %v397 = vpop.xlane.xlu0 %396
      %v398 = vsel %vm280, %v362, 0.0
      %399 = vadd.xlane.f32.xlu0 %v398
      %v400 = vpop.xlane.xlu0 %399
      %v401 = vsel %vm280, %v363, 0.0
      %402 = vadd.xlane.f32.xlu0 %v401
      %v403 = vpop.xlane.xlu0 %402
      %v404 = vsel %vm280, %v364, 0.0
      %405 = vadd.xlane.f32.xlu0 %v404
      %v406 = vpop.xlane.xlu0 %405
      %v407 = vsel %vm280, %v365, 0.0
      %408 = vadd.xlane.f32.xlu0 %v407
      %v409 = vpop.xlane.xlu0 %408
      %v410 = vsel %vm280, %v366, 0.0
      %411 = vadd.xlane.f32.xlu0 %v410
      %v412 = vpop.xlane.xlu0 %411
      %v413 = vsel %vm280, %v367, 0.0
      %414 = vadd.xlane.f32.xlu0 %v413
      %v415 = vpop.xlane.xlu0 %414
      %v416 = vmul.f32 %v370, %v335
      %v417 = vmul.f32 %v373, %v335
      %v418 = vmul.f32 %v376, %v335
      %v419 = vmul.f32 %v379, %v335
      %v420 = vmul.f32 %v382, %v335
      %v421 = vmul.f32 %v385, %v335
      %v422 = vmul.f32 %v388, %v335
      %v423 = vmul.f32 %v391, %v335
      %v424 = vmul.f32 %v394, %v335
      %v425 = vmul.f32 %v397, %v335
      %v426 = vmul.f32 %v400, %v335
      %v427 = vmul.f32 %v403, %v335
      %v428 = vmul.f32 %v406, %v335
      %v429 = vmul.f32 %v409, %v335
      %v430 = vmul.f32 %v412, %v335
      %v431 = vmul.f32 %v415, %v335
      %v432 = vmul.f32 %v336, %v336
      %v433 = vmul.f32 %v337, %v337
      %v434 = vmul.f32 %v338, %v338
      %v435 = vmul.f32 %v339, %v339
      %v436 = vmul.f32 %v340, %v340
      %v437 = vmul.f32 %v341, %v341
      %v438 = vmul.f32 %v342, %v342
      %v439 = vmul.f32 %v343, %v343
      %v440 = vmul.f32 %v344, %v344
      %v441 = vmul.f32 %v345, %v345
      %v442 = vmul.f32 %v346, %v346
      %v443 = vmul.f32 %v347, %v347
      %v444 = vmul.f32 %v348, %v348
      %v445 = vmul.f32 %v349, %v349
      %v446 = vmul.f32 %v350, %v350
      %v447 = vmul.f32 %v351, %v351
      %v448 = vsub.f32 %v416, %v432
      %v449 = vsub.f32 %v417, %v433
      %v450 = vsub.f32 %v418, %v434
      %v451 = vsub.f32 %v419, %v435
      %v452 = vsub.f32 %v420, %v436
      %v453 = vsub.f32 %v421, %v437
      %v454 = vsub.f32 %v422, %v438
      %v455 = vsub.f32 %v423, %v439
      %v456 = vsub.f32 %v424, %v440
      %v457 = vsub.f32 %v425, %v441
      %v458 = vsub.f32 %v426, %v442
      %v459 = vsub.f32 %v427, %v443
      %v460 = vsub.f32 %v428, %v444
      %v461 = vsub.f32 %v429, %v445
      %v462 = vsub.f32 %v430, %v446
      %v463 = vsub.f32 %v431, %v447
      %v464 = vadd.f32 %v448, 1e-05
      %v465 = vadd.f32 %v449, 1e-05
      %v466 = vadd.f32 %v450, 1e-05
      %v467 = vadd.f32 %v451, 1e-05
      %v468 = vadd.f32 %v452, 1e-05
      %v469 = vadd.f32 %v453, 1e-05
      %v470 = vadd.f32 %v454, 1e-05
      %v471 = vadd.f32 %v455, 1e-05
      %v472 = vadd.f32 %v456, 1e-05
      %v473 = vadd.f32 %v457, 1e-05
      %v474 = vadd.f32 %v458, 1e-05
      %v475 = vadd.f32 %v459, 1e-05
      %v476 = vadd.f32 %v460, 1e-05
      %v477 = vadd.f32 %v461, 1e-05
      %v478 = vadd.f32 %v462, 1e-05
      %v479 = vadd.f32 %v463, 1e-05
      %v480 = vrsqrt.pop %v464
      %v481 = vmul.f32 %v480, %v464
      %v482 = vmul.f32 %v481, %v480
      %v483 = vmul.f32 0.5, %v482
      %v484 = vsub.f32 1.5, %v483
      %v485 = vmul.f32 %v480, %v484
      %vm486 = vweird.f32 %v464
      %vm487 = vweird.f32 %v480
      %vm488 = vmor %vm486, %vm487
      %v489 = vsel %vm488, %v480, %v485
      %v490 = vrsqrt.pop %v465
      %v491 = vmul.f32 %v490, %v465
      %v492 = vmul.f32 %v491, %v490
      %v493 = vmul.f32 0.5, %v492
      %v494 = vsub.f32 1.5, %v493
      %v495 = vmul.f32 %v490, %v494
      %vm496 = vweird.f32 %v465
      %vm497 = vweird.f32 %v490
      %vm498 = vmor %vm496, %vm497
      %v499 = vsel %vm498, %v490, %v495
      %v500 = vrsqrt.pop %v466
      %v501 = vmul.f32 %v500, %v466
      %v502 = vmul.f32 %v501, %v500
      %v503 = vmul.f32 0.5, %v502
      %v504 = vsub.f32 1.5, %v503
      %v505 = vmul.f32 %v500, %v504
      %vm506 = vweird.f32 %v466
      %vm507 = vweird.f32 %v500
      %vm508 = vmor %vm506, %vm507
      %v509 = vsel %vm508, %v500, %v505
      %v510 = vrsqrt.pop %v467
      %v511 = vmul.f32 %v510, %v467
      %v512 = vmul.f32 %v511, %v510
      %v513 = vmul.f32 0.5, %v512
      %v514 = vsub.f32 1.5, %v513
      %v515 = vmul.f32 %v510, %v514
      %vm516 = vweird.f32 %v467
      %vm517 = vweird.f32 %v510
      %vm518 = vmor %vm516, %vm517
      %v519 = vsel %vm518, %v510, %v515
      %v520 = vrsqrt.pop %v468
      %v521 = vmul.f32 %v520, %v468
      %v522 = vmul.f32 %v521, %v520
      %v523 = vmul.f32 0.5, %v522
      %v524 = vsub.f32 1.5, %v523
      %v525 = vmul.f32 %v520, %v524
      %vm526 = vweird.f32 %v468
      %vm527 = vweird.f32 %v520
      %vm528 = vmor %vm526, %vm527
      %v529 = vsel %vm528, %v520, %v525
      %v530 = vrsqrt.pop %v469
      %v531 = vmul.f32 %v530, %v469
      %v532 = vmul.f32 %v531, %v530
      %v533 = vmul.f32 0.5, %v532
      %v534 = vsub.f32 1.5, %v533
      %v535 = vmul.f32 %v530, %v534
      %vm536 = vweird.f32 %v469
      %vm537 = vweird.f32 %v530
      %vm538 = vmor %vm536, %vm537
      %v539 = vsel %vm538, %v530, %v535
      %v540 = vrsqrt.pop %v470
      %v541 = vmul.f32 %v540, %v470
      %v542 = vmul.f32 %v541, %v540
      %v543 = vmul.f32 0.5, %v542
      %v544 = vsub.f32 1.5, %v543
      %v545 = vmul.f32 %v540, %v544
      %vm546 = vweird.f32 %v470
      %vm547 = vweird.f32 %v540
      %vm548 = vmor %vm546, %vm547
      %v549 = vsel %vm548, %v540, %v545
      %v550 = vrsqrt.pop %v471
      %v551 = vmul.f32 %v550, %v471
      %v552 = vmul.f32 %v551, %v550
      %v553 = vmul.f32 0.5, %v552
      %v554 = vsub.f32 1.5, %v553
      %v555 = vmul.f32 %v550, %v554
      %vm556 = vweird.f32 %v471
      %vm557 = vweird.f32 %v550
      %vm558 = vmor %vm556, %vm557
      %v559 = vsel %vm558, %v550, %v555
      %v560 = vrsqrt.pop %v472
      %v561 = vmul.f32 %v560, %v472
      %v562 = vmul.f32 %v561, %v560
      %v563 = vmul.f32 0.5, %v562
      %v564 = vsub.f32 1.5, %v563
      %v565 = vmul.f32 %v560, %v564
      %vm566 = vweird.f32 %v472
      %vm567 = vweird.f32 %v560
      %vm568 = vmor %vm566, %vm567
      %v569 = vsel %vm568, %v560, %v565
      %v570 = vrsqrt.pop %v473
      %v571 = vmul.f32 %v570, %v473
      %v572 = vmul.f32 %v571, %v570
      %v573 = vmul.f32 0.5, %v572
      %v574 = vsub.f32 1.5, %v573
      %v575 = vmul.f32 %v570, %v574
      %vm576 = vweird.f32 %v473
      %vm577 = vweird.f32 %v570
      %vm578 = vmor %vm576, %vm577
      %v579 = vsel %vm578, %v570, %v575
      %v580 = vrsqrt.pop %v474
      %v581 = vmul.f32 %v580, %v474
      %v582 = vmul.f32 %v581, %v580
      %v583 = vmul.f32 0.5, %v582
      %v584 = vsub.f32 1.5, %v583
      %v585 = vmul.f32 %v580, %v584
      %vm586 = vweird.f32 %v474
      %vm587 = vweird.f32 %v580
      %vm588 = vmor %vm586, %vm587
      %v589 = vsel %vm588, %v580, %v585
      %v590 = vrsqrt.pop %v475
      %v591 = vmul.f32 %v590, %v475
      %v592 = vmul.f32 %v591, %v590
      %v593 = vmul.f32 0.5, %v592
      %v594 = vsub.f32 1.5, %v593
      %v595 = vmul.f32 %v590, %v594
      %vm596 = vweird.f32 %v475
      %vm597 = vweird.f32 %v590
      %vm598 = vmor %vm596, %vm597
      %v599 = vsel %vm598, %v590, %v595
      %v600 = vrsqrt.pop %v476
      %v601 = vmul.f32 %v600, %v476
      %v602 = vmul.f32 %v601, %v600
      %v603 = vmul.f32 0.5, %v602
      %v604 = vsub.f32 1.5, %v603
      %v605 = vmul.f32 %v600, %v604
      %vm606 = vweird.f32 %v476
      %vm607 = vweird.f32 %v600
      %vm608 = vmor %vm606, %vm607
      %v609 = vsel %vm608, %v600, %v605
      %v610 = vrsqrt.pop %v477
      %v611 = vmul.f32 %v610, %v477
      %v612 = vmul.f32 %v611, %v610
      %v613 = vmul.f32 0.5, %v612
      %v614 = vsub.f32 1.5, %v613
      %v615 = vmul.f32 %v610, %v614
      %vm616 = vweird.f32 %v477
      %vm617 = vweird.f32 %v610
      %vm618 = vmor %vm616, %vm617
      %v619 = vsel %vm618, %v610, %v615
      %v620 = vrsqrt.pop %v478
      %v621 = vmul.f32 %v620, %v478
      %v622 = vmul.f32 %v621, %v620
      %v623 = vmul.f32 0.5, %v622
      %v624 = vsub.f32 1.5, %v623
      %v625 = vmul.f32 %v620, %v624
      %vm626 = vweird.f32 %v478
      %vm627 = vweird.f32 %v620
      %vm628 = vmor %vm626, %vm627
      %v629 = vsel %vm628, %v620, %v625
      %v630 = vrsqrt.pop %v479
      %v631 = vmul.f32 %v630, %v479
      %v632 = vmul.f32 %v631, %v630
      %v633 = vmul.f32 0.5, %v632
      %v634 = vsub.f32 1.5, %v633
      %v635 = vmul.f32 %v630, %v634
      %vm636 = vweird.f32 %v479
      %vm637 = vweird.f32 %v630
      %vm638 = vmor %vm636, %vm637
      %v639 = vsel %vm638, %v630, %v635
      %v640 = vld [vmem:[%s2] sm:$0x1]
      %v641 = vld [vmem:[%s2 + $0x1] sm:$0x1]
      %v642 = vsub.f32 %v264, %v336
      %v643 = vsub.f32 %v265, %v337
      %v644 = vsub.f32 %v266, %v338
      %v645 = vsub.f32 %v267, %v339
      %v646 = vsub.f32 %v268, %v340
      %v647 = vsub.f32 %v269, %v341
      %v648 = vsub.f32 %v270, %v342
      %v649 = vsub.f32 %v271, %v343
      %v650 = vsub.f32 %v272, %v344
      %v651 = vsub.f32 %v273, %v345
      %v652 = vsub.f32 %v274, %v346
      %v653 = vsub.f32 %v275, %v347
      %v654 = vsub.f32 %v276, %v348
      %v655 = vsub.f32 %v277, %v349
      %v656 = vsub.f32 %v278, %v350
      %v657 = vsub.f32 %v279, %v351
      %v658 = vmul.f32 %v642, %v489
      %v659 = vmul.f32 %v643, %v499
      %v660 = vmul.f32 %v644, %v509
      %v661 = vmul.f32 %v645, %v519
      %v662 = vmul.f32 %v646, %v529
      %v663 = vmul.f32 %v647, %v539
      %v664 = vmul.f32 %v648, %v549
      %v665 = vmul.f32 %v649, %v559
      %v666 = vmul.f32 %v650, %v569
      %v667 = vmul.f32 %v651, %v579
      %v668 = vmul.f32 %v652, %v589
      %v669 = vmul.f32 %v653, %v599
      %v670 = vmul.f32 %v654, %v609
      %v671 = vmul.f32 %v655, %v619
      %v672 = vmul.f32 %v656, %v629
      %v673 = vmul.f32 %v657, %v639
      %v674 = vperm.slane %v640, 0
      %v675 = vmul.f32 %v658, %v674
      %v676 = vmul.f32 %v659, %v674
      %v677 = vmul.f32 %v660, %v674
      %v678 = vmul.f32 %v661, %v674
      %v679 = vmul.f32 %v662, %v674
      %v680 = vmul.f32 %v663, %v674
      %v681 = vmul.f32 %v664, %v674
      %v682 = vmul.f32 %v665, %v674
      %v683 = vmul.f32 %v666, %v674
      %v684 = vmul.f32 %v667, %v674
      %v685 = vmul.f32 %v668, %v674
      %v686 = vmul.f32 %v669, %v674
      %v687 = vmul.f32 %v670, %v674
      %v688 = vmul.f32 %v671, %v674
      %v689 = vmul.f32 %v672, %v674
      %v690 = vmul.f32 %v673, %v674
      %v691 = vperm.slane %v641, 0
      %v692 = vadd.f32 %v675, %v691
      %v693 = vadd.f32 %v676, %v691
      %v694 = vadd.f32 %v677, %v691
      %v695 = vadd.f32 %v678, %v691
      %v696 = vadd.f32 %v679, %v691
      %v697 = vadd.f32 %v680, %v691
      %v698 = vadd.f32 %v681, %v691
      %v699 = vadd.f32 %v682, %v691
      %v700 = vadd.f32 %v683, %v691
      %v701 = vadd.f32 %v684, %v691
      %v702 = vadd.f32 %v685, %v691
      %v703 = vadd.f32 %v686, %v691
      %v704 = vadd.f32 %v687, %v691
      %v705 = vadd.f32 %v688, %v691
      %v706 = vadd.f32 %v689, %v691
      %v707 = vadd.f32 %v690, %v691
      %708 = vst.msk [vmem:[%s256] sm:$0xff] %vm280, %v692
      %709 = vst.msk [vmem:[%s256 + $0x8] sm:$0xff] %vm280, %v693
      %710 = vst.msk [vmem:[%s256 + $0x10] sm:$0xff] %vm280, %v694
      %711 = vst.msk [vmem:[%s256 + $0x18] sm:$0xff] %vm280, %v695
      %712 = vst.msk [vmem:[%s256 + $0x20] sm:$0xff] %vm280, %v696
      %713 = vst.msk [vmem:[%s256 + $0x28] sm:$0xff] %vm280, %v697
      %714 = vst.msk [vmem:[%s256 + $0x30] sm:$0xff] %vm280, %v698
      %715 = vst.msk [vmem:[%s256 + $0x38] sm:$0xff] %vm280, %v699
      %716 = vst.msk [vmem:[%s256 + $0x40] sm:$0xff] %vm280, %v700
      %717 = vst.msk [vmem:[%s256 + $0x48] sm:$0xff] %vm280, %v701
      %718 = vst.msk [vmem:[%s256 + $0x50] sm:$0xff] %vm280, %v702
      %719 = vst.msk [vmem:[%s256 + $0x58] sm:$0xff] %vm280, %v703
      %720 = vst.msk [vmem:[%s256 + $0x60] sm:$0xff] %vm280, %v704
      %721 = vst.msk [vmem:[%s256 + $0x68] sm:$0xff] %vm280, %v705
      %722 = vst.msk [vmem:[%s256 + $0x70] sm:$0xff] %vm280, %v706
      %723 = vst.msk [vmem:[%s256 + $0x78] sm:$0xff] %vm280, %v707
      %v724 = vld [vmem:[%s250] sm:$0xff]
      %v725 = vld [vmem:[%s250 + $0x8] sm:$0xff]
      %v726 = vld [vmem:[%s250 + $0x10] sm:$0xff]
      %v727 = vld [vmem:[%s250 + $0x18] sm:$0xff]
      %v728 = vld [vmem:[%s250 + $0x20] sm:$0xff]
      %v729 = vld [vmem:[%s250 + $0x28] sm:$0xff]
      %v730 = vld [vmem:[%s250 + $0x30] sm:$0xff]
      %v731 = vld [vmem:[%s250 + $0x38] sm:$0xff]
      %v732 = vld [vmem:[%s250 + $0x40] sm:$0xff]
      %v733 = vld [vmem:[%s250 + $0x48] sm:$0xff]
      %v734 = vld [vmem:[%s250 + $0x50] sm:$0xff]
      %v735 = vld [vmem:[%s250 + $0x58] sm:$0xff]
      %v736 = vld [vmem:[%s250 + $0x60] sm:$0xff]
      %v737 = vld [vmem:[%s250 + $0x68] sm:$0xff]
      %v738 = vld [vmem:[%s250 + $0x70] sm:$0xff]
      %v739 = vld [vmem:[%s250 + $0x78] sm:$0xff]
      %v740 = vmul.f32 %v724, %v724
      %v741 = vmul.f32 %v725, %v725
      %v742 = vmul.f32 %v726, %v726
      %v743 = vmul.f32 %v727, %v727
      %v744 = vmul.f32 %v728, %v728
      %v745 = vmul.f32 %v729, %v729
      %v746 = vmul.f32 %v730, %v730
      %v747 = vmul.f32 %v731, %v731
      %v748 = vmul.f32 %v732, %v732
      %v749 = vmul.f32 %v733, %v733
      %v750 = vmul.f32 %v734, %v734
      %v751 = vmul.f32 %v735, %v735
      %v752 = vmul.f32 %v736, %v736
      %v753 = vmul.f32 %v737, %v737
      %v754 = vmul.f32 %v738, %v738
      %v755 = vmul.f32 %v739, %v739
      %v756 = vld [vmem:[%s3] sm:$0xff]
      %v757 = vld [vmem:[%s3 + $0x8] sm:$0xff]
      %v758 = vld [vmem:[%s3 + $0x10] sm:$0xff]
      %vm759 = vcmask 195584
      %v761 = vsel %vm759, %v740, 0
      %v764 = vsel %vm759, %v741, 0
      %v767 = vsel %vm759, %v742, 0
      %v770 = vsel %vm759, %v743, 0
      %v773 = vsel %vm759, %v744, 0
      %v776 = vsel %vm759, %v745, 0
      %v779 = vsel %vm759, %v746, 0
      %v782 = vsel %vm759, %v747, 0
      %v785 = vsel %vm759, %v748, 0
      %v788 = vsel %vm759, %v749, 0
      %v791 = vsel %vm759, %v750, 0
      %v794 = vsel %vm759, %v751, 0
      %v797 = vsel %vm759, %v752, 0
      %v800 = vsel %vm759, %v753, 0
      %v803 = vsel %vm759, %v754, 0
      %v806 = vsel %vm759, %v755, 0
      %808 = vmatpush.msra.mxu0 0.0
      %809 = vmatpush.msra.mxu0 0.0
      %810 = vmatpush.msra.mxu0 0.0
      %811 = vmatpush.msra.mxu0 0.0
      %812 = vmatpush.msra.mxu0 0.0
      %813 = vmatpush.msra.mxu0 0.0
      %814 = vmatpush.msra.mxu0 0.0
      %815 = vmatpush.msra.mxu0 0.0
      %816 = vmatpush.msra.mxu0 0.0
      %817 = vmatpush.msra.mxu0 0.0
      %818 = vmatpush.msra.mxu0 0.0
      %819 = vmatpush.msra.mxu0 0.0
      %820 = vmatpush.msra.mxu0 0.0
      %v821 = vand.u32 %v758, 4294901760
      %822 = vmatpush.msra.mxu0 %v821
      %v823 = vand.u32 %v757, 4294901760
      %824 = vmatpush.msra.mxu0 %v823
      %v825 = vand.u32 %v756, 4294901760
      %826 = vmatpush.msra.mxu0 %v825
      %v827 = vand.u32 %v761, 4294901760
      %v828 = vsub.f32 %v761, %v827
      %v829 = vand.u32 %v828, 4294901760
      %v830 = vsub.f32 %v828, %v829
      %v831 = vand.u32 %v830, 4294901760
      %832 = vmatmul.f32.gmra.mxu0 %v831
      %v833 = vpop.f32.mrf.mxu0
      %v834 = vadd.f32 0.0, %v833
      %v835 = vand.u32 %v764, 4294901760
      %v836 = vsub.f32 %v764, %v835
      %v837 = vand.u32 %v836, 4294901760
      %v838 = vsub.f32 %v836, %v837
      %v839 = vand.u32 %v838, 4294901760
      %840 = vmatmul.f32.gmra.mxu0 %v839
      %v841 = vpop.f32.mrf.mxu0
      %v842 = vadd.f32 0.0, %v841
      %v843 = vand.u32 %v767, 4294901760
      %v844 = vsub.f32 %v767, %v843
      %v845 = vand.u32 %v844, 4294901760
      %v846 = vsub.f32 %v844, %v845
      %v847 = vand.u32 %v846, 4294901760
      %848 = vmatmul.f32.gmra.mxu0 %v847
      %v849 = vpop.f32.mrf.mxu0
      %v850 = vadd.f32 0.0, %v849
      %v851 = vand.u32 %v770, 4294901760
      %v852 = vsub.f32 %v770, %v851
      %v853 = vand.u32 %v852, 4294901760
      %v854 = vsub.f32 %v852, %v853
      %v855 = vand.u32 %v854, 4294901760
      %856 = vmatmul.f32.gmra.mxu0 %v855
      %v857 = vpop.f32.mrf.mxu0
      %v858 = vadd.f32 0.0, %v857
      %v859 = vand.u32 %v773, 4294901760
      %v860 = vsub.f32 %v773, %v859
      %v861 = vand.u32 %v860, 4294901760
      %v862 = vsub.f32 %v860, %v861
      %v863 = vand.u32 %v862, 4294901760
      %864 = vmatmul.f32.gmra.mxu0 %v863
      %v865 = vpop.f32.mrf.mxu0
      %v866 = vadd.f32 0.0, %v865
      %v867 = vand.u32 %v776, 4294901760
      %v868 = vsub.f32 %v776, %v867
      %v869 = vand.u32 %v868, 4294901760
      %v870 = vsub.f32 %v868, %v869
      %v871 = vand.u32 %v870, 4294901760
      %872 = vmatmul.f32.gmra.mxu0 %v871
      %v873 = vpop.f32.mrf.mxu0
      %v874 = vadd.f32 0.0, %v873
      %v875 = vand.u32 %v779, 4294901760
      %v876 = vsub.f32 %v779, %v875
      %v877 = vand.u32 %v876, 4294901760
      %v878 = vsub.f32 %v876, %v877
      %v879 = vand.u32 %v878, 4294901760
      %880 = vmatmul.f32.gmra.mxu0 %v879
      %v881 = vpop.f32.mrf.mxu0
      %v882 = vadd.f32 0.0, %v881
      %v883 = vand.u32 %v782, 4294901760
      %v884 = vsub.f32 %v782, %v883
      %v885 = vand.u32 %v884, 4294901760
      %v886 = vsub.f32 %v884, %v885
      %v887 = vand.u32 %v886, 4294901760
      %888 = vmatmul.f32.gmra.mxu0 %v887
      %v889 = vpop.f32.mrf.mxu0
      %v890 = vadd.f32 0.0, %v889
      %v891 = vand.u32 %v785, 4294901760
      %v892 = vsub.f32 %v785, %v891
      %v893 = vand.u32 %v892, 4294901760
      %v894 = vsub.f32 %v892, %v893
      %v895 = vand.u32 %v894, 4294901760
      %896 = vmatmul.f32.gmra.mxu0 %v895
      %v897 = vpop.f32.mrf.mxu0
      %v898 = vadd.f32 0.0, %v897
      %v899 = vand.u32 %v788, 4294901760
      %v900 = vsub.f32 %v788, %v899
      %v901 = vand.u32 %v900, 4294901760
      %v902 = vsub.f32 %v900, %v901
      %v903 = vand.u32 %v902, 4294901760
      %904 = vmatmul.f32.gmra.mxu0 %v903
      %v905 = vpop.f32.mrf.mxu0
      %v906 = vadd.f32 0.0, %v905
      %v907 = vand.u32 %v791, 4294901760
      %v908 = vsub.f32 %v791, %v907
      %v909 = vand.u32 %v908, 4294901760
      %v910 = vsub.f32 %v908, %v909
      %v911 = vand.u32 %v910, 4294901760
      %912 = vmatmul.f32.gmra.mxu0 %v911
      %v913 = vpop.f32.mrf.mxu0
      %v914 = vadd.f32 0.0, %v913
      %v915 = vand.u32 %v794, 4294901760
      %v916 = vsub.f32 %v794, %v915
      %v917 = vand.u32 %v916, 4294901760
      %v918 = vsub.f32 %v916, %v917
      %v919 = vand.u32 %v918, 4294901760
      %920 = vmatmul.f32.gmra.mxu0 %v919
      %v921 = vpop.f32.mrf.mxu0
      %v922 = vadd.f32 0.0, %v921
      %v923 = vand.u32 %v797, 4294901760
      %v924 = vsub.f32 %v797, %v923
      %v925 = vand.u32 %v924, 4294901760
      %v926 = vsub.f32 %v924, %v925
      %v927 = vand.u32 %v926, 4294901760
      %928 = vmatmul.f32.gmra.mxu0 %v927
      %v929 = vpop.f32.mrf.mxu0
      %v930 = vadd.f32 0.0, %v929
      %v931 = vand.u32 %v800, 4294901760
      %v932 = vsub.f32 %v800, %v931
      %v933 = vand.u32 %v932, 4294901760
      %v934 = vsub.f32 %v932, %v933
      %v935 = vand.u32 %v934, 4294901760
      %936 = vmatmul.f32.gmra.mxu0 %v935
      %v937 = vpop.f32.mrf.mxu0
      %v938 = vadd.f32 0.0, %v937
      %v939 = vand.u32 %v803, 4294901760
      %v940 = vsub.f32 %v803, %v939
      %v941 = vand.u32 %v940, 4294901760
      %v942 = vsub.f32 %v940, %v941
      %v943 = vand.u32 %v942, 4294901760
      %944 = vmatmul.f32.gmra.mxu0 %v943
      %v945 = vpop.f32.mrf.mxu0
      %v946 = vadd.f32 0.0, %v945
      %v947 = vand.u32 %v806, 4294901760
      %v948 = vsub.f32 %v806, %v947
      %v949 = vand.u32 %v948, 4294901760
      %v950 = vsub.f32 %v948, %v949
      %v951 = vand.u32 %v950, 4294901760
      %952 = vmatmul.f32.gmra.mxu0 %v951
      %v953 = vpop.f32.mrf.mxu0
      %v954 = vadd.f32 0.0, %v953
      %955 = vdwg.mxu0
      %956 = vmatpush.msra.mxu0 0.0
      %957 = vmatpush.msra.mxu0 0.0
      %958 = vmatpush.msra.mxu0 0.0
      %959 = vmatpush.msra.mxu0 0.0
      %960 = vmatpush.msra.mxu0 0.0
      %961 = vmatpush.msra.mxu0 0.0
      %962 = vmatpush.msra.mxu0 0.0
      %963 = vmatpush.msra.mxu0 0.0
      %964 = vmatpush.msra.mxu0 0.0
      %965 = vmatpush.msra.mxu0 0.0
      %966 = vmatpush.msra.mxu0 0.0
      %967 = vmatpush.msra.mxu0 0.0
      %968 = vmatpush.msra.mxu0 0.0
      %v969 = vand.u32 %v758, 4294901760
      %v970 = vsub.f32 %v758, %v969
      %v971 = vand.u32 %v970, 4294901760
      %v972 = vsub.f32 %v970, %v971
      %v973 = vand.u32 %v972, 4294901760
      %974 = vmatpush.msra.mxu0 %v973
      %v975 = vand.u32 %v757, 4294901760
      %v976 = vsub.f32 %v757, %v975
      %v977 = vand.u32 %v976, 4294901760
      %v978 = vsub.f32 %v976, %v977
      %v979 = vand.u32 %v978, 4294901760
      %980 = vmatpush.msra.mxu0 %v979
      %v981 = vand.u32 %v756, 4294901760
      %v982 = vsub.f32 %v756, %v981
      %v983 = vand.u32 %v982, 4294901760
      %v984 = vsub.f32 %v982, %v983
      %v985 = vand.u32 %v984, 4294901760
      %986 = vmatpush.msra.mxu0 %v985
      %v987 = vand.u32 %v761, 4294901760
      %988 = vmatmul.f32.gmra.mxu0 %v987
      %v989 = vpop.f32.mrf.mxu0
      %v990 = vadd.f32 %v834, %v989
      %v991 = vand.u32 %v764, 4294901760
      %992 = vmatmul.f32.gmra.mxu0 %v991
      %v993 = vpop.f32.mrf.mxu0
      %v994 = vadd.f32 %v842, %v993
      %v995 = vand.u32 %v767, 4294901760
      %996 = vmatmul.f32.gmra.mxu0 %v995
      %v997 = vpop.f32.mrf.mxu0
      %v998 = vadd.f32 %v850, %v997
      %v999 = vand.u32 %v770, 4294901760
      %1000 = vmatmul.f32.gmra.mxu0 %v999
      %v1001 = vpop.f32.mrf.mxu0
      %v1002 = vadd.f32 %v858, %v1001
      %v1003 = vand.u32 %v773, 4294901760
      %1004 = vmatmul.f32.gmra.mxu0 %v1003
      %v1005 = vpop.f32.mrf.mxu0
      %v1006 = vadd.f32 %v866, %v1005
      %v1007 = vand.u32 %v776, 4294901760
      %1008 = vmatmul.f32.gmra.mxu0 %v1007
      %v1009 = vpop.f32.mrf.mxu0
      %v1010 = vadd.f32 %v874, %v1009
      %v1011 = vand.u32 %v779, 4294901760
      %1012 = vmatmul.f32.gmra.mxu0 %v1011
      %v1013 = vpop.f32.mrf.mxu0
      %v1014 = vadd.f32 %v882, %v1013
      %v1015 = vand.u32 %v782, 4294901760
      %1016 = vmatmul.f32.gmra.mxu0 %v1015
      %v1017 = vpop.f32.mrf.mxu0
      %v1018 = vadd.f32 %v890, %v1017
      %v1019 = vand.u32 %v785, 4294901760
      %1020 = vmatmul.f32.gmra.mxu0 %v1019
      %v1021 = vpop.f32.mrf.mxu0
      %v1022 = vadd.f32 %v898, %v1021
      %v1023 = vand.u32 %v788, 4294901760
      %1024 = vmatmul.f32.gmra.mxu0 %v1023
      %v1025 = vpop.f32.mrf.mxu0
      %v1026 = vadd.f32 %v906, %v1025
      %v1027 = vand.u32 %v791, 4294901760
      %1028 = vmatmul.f32.gmra.mxu0 %v1027
      %v1029 = vpop.f32.mrf.mxu0
      %v1030 = vadd.f32 %v914, %v1029
      %v1031 = vand.u32 %v794, 4294901760
      %1032 = vmatmul.f32.gmra.mxu0 %v1031
      %v1033 = vpop.f32.mrf.mxu0
      %v1034 = vadd.f32 %v922, %v1033
      %v1035 = vand.u32 %v797, 4294901760
      %1036 = vmatmul.f32.gmra.mxu0 %v1035
      %v1037 = vpop.f32.mrf.mxu0
      %v1038 = vadd.f32 %v930, %v1037
      %v1039 = vand.u32 %v800, 4294901760
      %1040 = vmatmul.f32.gmra.mxu0 %v1039
      %v1041 = vpop.f32.mrf.mxu0
      %v1042 = vadd.f32 %v938, %v1041
      %v1043 = vand.u32 %v803, 4294901760
      %1044 = vmatmul.f32.gmra.mxu0 %v1043
      %v1045 = vpop.f32.mrf.mxu0
      %v1046 = vadd.f32 %v946, %v1045
      %v1047 = vand.u32 %v806, 4294901760
      %1048 = vmatmul.f32.gmra.mxu0 %v1047
      %v1049 = vpop.f32.mrf.mxu0
      %v1050 = vadd.f32 %v954, %v1049
      %1051 = vdwg.mxu0
      %1052 = vmatpush.msra.mxu0 0.0
      %1053 = vmatpush.msra.mxu0 0.0
      %1054 = vmatpush.msra.mxu0 0.0
      %1055 = vmatpush.msra.mxu0 0.0
      %1056 = vmatpush.msra.mxu0 0.0
      %1057 = vmatpush.msra.mxu0 0.0
      %1058 = vmatpush.msra.mxu0 0.0
      %1059 = vmatpush.msra.mxu0 0.0
      %1060 = vmatpush.msra.mxu0 0.0
      %1061 = vmatpush.msra.mxu0 0.0
      %1062 = vmatpush.msra.mxu0 0.0
      %1063 = vmatpush.msra.mxu0 0.0
      %1064 = vmatpush.msra.mxu0 0.0
      %v1065 = vand.u32 %v758, 4294901760
      %v1066 = vsub.f32 %v758, %v1065
      %1067 = vmatpush.msra.mxu0 %v1066
      %v1068 = vand.u32 %v757, 4294901760
      %v1069 = vsub.f32 %v757, %v1068
      %1070 = vmatpush.msra.mxu0 %v1069
      %v1071 = vand.u32 %v756, 4294901760
      %v1072 = vsub.f32 %v756, %v1071
      %1073 = vmatpush.msra.mxu0 %v1072
      %v1074 = vand.u32 %v761, 4294901760
      %v1075 = vsub.f32 %v761, %v1074
      %1076 = vmatmul.f32.gmra.mxu0 %v1075
      %v1077 = vpop.f32.mrf.mxu0
      %v1078 = vadd.f32 %v990, %v1077
      %v1079 = vand.u32 %v764, 4294901760
      %v1080 = vsub.f32 %v764, %v1079
      %1081 = vmatmul.f32.gmra.mxu0 %v1080
      %v1082 = vpop.f32.mrf.mxu0
      %v1083 = vadd.f32 %v994, %v1082
      %v1084 = vand.u32 %v767, 4294901760
      %v1085 = vsub.f32 %v767, %v1084
      %1086 = vmatmul.f32.gmra.mxu0 %v1085
      %v1087 = vpop.f32.mrf.mxu0
      %v1088 = vadd.f32 %v998, %v1087
      %v1089 = vand.u32 %v770, 4294901760
      %v1090 = vsub.f32 %v770, %v1089
      %1091 = vmatmul.f32.gmra.mxu0 %v1090
      %v1092 = vpop.f32.mrf.mxu0
      %v1093 = vadd.f32 %v1002, %v1092
      %v1094 = vand.u32 %v773, 4294901760
      %v1095 = vsub.f32 %v773, %v1094
      %1096 = vmatmul.f32.gmra.mxu0 %v1095
      %v1097 = vpop.f32.mrf.mxu0
      %v1098 = vadd.f32 %v1006, %v1097
      %v1099 = vand.u32 %v776, 4294901760
      %v1100 = vsub.f32 %v776, %v1099
      %1101 = vmatmul.f32.gmra.mxu0 %v1100
      %v1102 = vpop.f32.mrf.mxu0
      %v1103 = vadd.f32 %v1010, %v1102
      %v1104 = vand.u32 %v779, 4294901760
      %v1105 = vsub.f32 %v779, %v1104
      %1106 = vmatmul.f32.gmra.mxu0 %v1105
      %v1107 = vpop.f32.mrf.mxu0
      %v1108 = vadd.f32 %v1014, %v1107
      %v1109 = vand.u32 %v782, 4294901760
      %v1110 = vsub.f32 %v782, %v1109
      %1111 = vmatmul.f32.gmra.mxu0 %v1110
      %v1112 = vpop.f32.mrf.mxu0
      %v1113 = vadd.f32 %v1018, %v1112
      %v1114 = vand.u32 %v785, 4294901760
      %v1115 = vsub.f32 %v785, %v1114
      %1116 = vmatmul.f32.gmra.mxu0 %v1115
      %v1117 = vpop.f32.mrf.mxu0
      %v1118 = vadd.f32 %v1022, %v1117
      %v1119 = vand.u32 %v788, 4294901760
      %v1120 = vsub.f32 %v788, %v1119
      %1121 = vmatmul.f32.gmra.mxu0 %v1120
      %v1122 = vpop.f32.mrf.mxu0
      %v1123 = vadd.f32 %v1026, %v1122
      %v1124 = vand.u32 %v791, 4294901760
      %v1125 = vsub.f32 %v791, %v1124
      %1126 = vmatmul.f32.gmra.mxu0 %v1125
      %v1127 = vpop.f32.mrf.mxu0
      %v1128 = vadd.f32 %v1030, %v1127
      %v1129 = vand.u32 %v794, 4294901760
      %v1130 = vsub.f32 %v794, %v1129
      %1131 = vmatmul.f32.gmra.mxu0 %v1130
      %v1132 = vpop.f32.mrf.mxu0
      %v1133 = vadd.f32 %v1034, %v1132
      %v1134 = vand.u32 %v797, 4294901760
      %v1135 = vsub.f32 %v797, %v1134
      %1136 = vmatmul.f32.gmra.mxu0 %v1135
      %v1137 = vpop.f32.mrf.mxu0
      %v1138 = vadd.f32 %v1038, %v1137
      %v1139 = vand.u32 %v800, 4294901760
      %v1140 = vsub.f32 %v800, %v1139
      %1141 = vmatmul.f32.gmra.mxu0 %v1140
      %v1142 = vpop.f32.mrf.mxu0
      %v1143 = vadd.f32 %v1042, %v1142
      %v1144 = vand.u32 %v803, 4294901760
      %v1145 = vsub.f32 %v803, %v1144
      %1146 = vmatmul.f32.gmra.mxu0 %v1145
      %v1147 = vpop.f32.mrf.mxu0
      %v1148 = vadd.f32 %v1046, %v1147
      %v1149 = vand.u32 %v806, 4294901760
      %v1150 = vsub.f32 %v806, %v1149
      %1151 = vmatmul.f32.gmra.mxu0 %v1150
      %v1152 = vpop.f32.mrf.mxu0
      %v1153 = vadd.f32 %v1050, %v1152
      %1154 = vdwg.mxu0
      %1155 = vmatpush.msra.mxu0 0.0
      %1156 = vmatpush.msra.mxu0 0.0
      %1157 = vmatpush.msra.mxu0 0.0
      %1158 = vmatpush.msra.mxu0 0.0
      %1159 = vmatpush.msra.mxu0 0.0
      %1160 = vmatpush.msra.mxu0 0.0
      %1161 = vmatpush.msra.mxu0 0.0
      %1162 = vmatpush.msra.mxu0 0.0
      %1163 = vmatpush.msra.mxu0 0.0
      %1164 = vmatpush.msra.mxu0 0.0
      %1165 = vmatpush.msra.mxu0 0.0
      %1166 = vmatpush.msra.mxu0 0.0
      %1167 = vmatpush.msra.mxu0 0.0
      %v1168 = vand.u32 %v758, 4294901760
      %1169 = vmatpush.msra.mxu0 %v1168
      %v1170 = vand.u32 %v757, 4294901760
      %1171 = vmatpush.msra.mxu0 %v1170
      %v1172 = vand.u32 %v756, 4294901760
      %1173 = vmatpush.msra.mxu0 %v1172
      %v1174 = vand.u32 %v761, 4294901760
      %v1175 = vsub.f32 %v761, %v1174
      %v1176 = vand.u32 %v1175, 4294901760
      %1177 = vmatmul.f32.gmra.mxu0 %v1176
      %v1178 = vpop.f32.mrf.mxu0
      %v1179 = vadd.f32 %v1078, %v1178
      %v1180 = vand.u32 %v764, 4294901760
      %v1181 = vsub.f32 %v764, %v1180
      %v1182 = vand.u32 %v1181, 4294901760
      %1183 = vmatmul.f32.gmra.mxu0 %v1182
      %v1184 = vpop.f32.mrf.mxu0
      %v1185 = vadd.f32 %v1083, %v1184
      %v1186 = vand.u32 %v767, 4294901760
      %v1187 = vsub.f32 %v767, %v1186
      %v1188 = vand.u32 %v1187, 4294901760
      %1189 = vmatmul.f32.gmra.mxu0 %v1188
      %v1190 = vpop.f32.mrf.mxu0
      %v1191 = vadd.f32 %v1088, %v1190
      %v1192 = vand.u32 %v770, 4294901760
      %v1193 = vsub.f32 %v770, %v1192
      %v1194 = vand.u32 %v1193, 4294901760
      %1195 = vmatmul.f32.gmra.mxu0 %v1194
      %v1196 = vpop.f32.mrf.mxu0
      %v1197 = vadd.f32 %v1093, %v1196
      %v1198 = vand.u32 %v773, 4294901760
      %v1199 = vsub.f32 %v773, %v1198
      %v1200 = vand.u32 %v1199, 4294901760
      %1201 = vmatmul.f32.gmra.mxu0 %v1200
      %v1202 = vpop.f32.mrf.mxu0
      %v1203 = vadd.f32 %v1098, %v1202
      %v1204 = vand.u32 %v776, 4294901760
      %v1205 = vsub.f32 %v776, %v1204
      %v1206 = vand.u32 %v1205, 4294901760
      %1207 = vmatmul.f32.gmra.mxu0 %v1206
      %v1208 = vpop.f32.mrf.mxu0
      %v1209 = vadd.f32 %v1103, %v1208
      %v1210 = vand.u32 %v779, 4294901760
      %v1211 = vsub.f32 %v779, %v1210
      %v1212 = vand.u32 %v1211, 4294901760
      %1213 = vmatmul.f32.gmra.mxu0 %v1212
      %v1214 = vpop.f32.mrf.mxu0
      %v1215 = vadd.f32 %v1108, %v1214
      %v1216 = vand.u32 %v782, 4294901760
      %v1217 = vsub.f32 %v782, %v1216
      %v1218 = vand.u32 %v1217, 4294901760
      %1219 = vmatmul.f32.gmra.mxu0 %v1218
      %v1220 = vpop.f32.mrf.mxu0
      %v1221 = vadd.f32 %v1113, %v1220
      %v1222 = vand.u32 %v785, 4294901760
      %v1223 = vsub.f32 %v785, %v1222
      %v1224 = vand.u32 %v1223, 4294901760
      %1225 = vmatmul.f32.gmra.mxu0 %v1224
      %v1226 = vpop.f32.mrf.mxu0
      %v1227 = vadd.f32 %v1118, %v1226
      %v1228 = vand.u32 %v788, 4294901760
      %v1229 = vsub.f32 %v788, %v1228
      %v1230 = vand.u32 %v1229, 4294901760
      %1231 = vmatmul.f32.gmra.mxu0 %v1230
      %v1232 = vpop.f32.mrf.mxu0
      %v1233 = vadd.f32 %v1123, %v1232
      %v1234 = vand.u32 %v791, 4294901760
      %v1235 = vsub.f32 %v791, %v1234
      %v1236 = vand.u32 %v1235, 4294901760
      %1237 = vmatmul.f32.gmra.mxu0 %v1236
      %v1238 = vpop.f32.mrf.mxu0
      %v1239 = vadd.f32 %v1128, %v1238
      %v1240 = vand.u32 %v794, 4294901760
      %v1241 = vsub.f32 %v794, %v1240
      %v1242 = vand.u32 %v1241, 4294901760
      %1243 = vmatmul.f32.gmra.mxu0 %v1242
      %v1244 = vpop.f32.mrf.mxu0
      %v1245 = vadd.f32 %v1133, %v1244
      %v1246 = vand.u32 %v797, 4294901760
      %v1247 = vsub.f32 %v797, %v1246
      %v1248 = vand.u32 %v1247, 4294901760
      %1249 = vmatmul.f32.gmra.mxu0 %v1248
      %v1250 = vpop.f32.mrf.mxu0
      %v1251 = vadd.f32 %v1138, %v1250
      %v1252 = vand.u32 %v800, 4294901760
      %v1253 = vsub.f32 %v800, %v1252
      %v1254 = vand.u32 %v1253, 4294901760
      %1255 = vmatmul.f32.gmra.mxu0 %v1254
      %v1256 = vpop.f32.mrf.mxu0
      %v1257 = vadd.f32 %v1143, %v1256
      %v1258 = vand.u32 %v803, 4294901760
      %v1259 = vsub.f32 %v803, %v1258
      %v1260 = vand.u32 %v1259, 4294901760
      %1261 = vmatmul.f32.gmra.mxu0 %v1260
      %v1262 = vpop.f32.mrf.mxu0
      %v1263 = vadd.f32 %v1148, %v1262
      %v1264 = vand.u32 %v806, 4294901760
      %v1265 = vsub.f32 %v806, %v1264
      %v1266 = vand.u32 %v1265, 4294901760
      %1267 = vmatmul.f32.gmra.mxu0 %v1266
      %v1268 = vpop.f32.mrf.mxu0
      %v1269 = vadd.f32 %v1153, %v1268
      %1270 = vdwg.mxu0
      %1271 = vmatpush.msra.mxu0 0.0
      %1272 = vmatpush.msra.mxu0 0.0
      %1273 = vmatpush.msra.mxu0 0.0
      %1274 = vmatpush.msra.mxu0 0.0
      %1275 = vmatpush.msra.mxu0 0.0
      %1276 = vmatpush.msra.mxu0 0.0
      %1277 = vmatpush.msra.mxu0 0.0
      %1278 = vmatpush.msra.mxu0 0.0
      %1279 = vmatpush.msra.mxu0 0.0
      %1280 = vmatpush.msra.mxu0 0.0
      %1281 = vmatpush.msra.mxu0 0.0
      %1282 = vmatpush.msra.mxu0 0.0
      %1283 = vmatpush.msra.mxu0 0.0
      %v1284 = vand.u32 %v758, 4294901760
      %v1285 = vsub.f32 %v758, %v1284
      %v1286 = vand.u32 %v1285, 4294901760
      %1287 = vmatpush.msra.mxu0 %v1286
      %v1288 = vand.u32 %v757, 4294901760
      %v1289 = vsub.f32 %v757, %v1288
      %v1290 = vand.u32 %v1289, 4294901760
      %1291 = vmatpush.msra.mxu0 %v1290
      %v1292 = vand.u32 %v756, 4294901760
      %v1293 = vsub.f32 %v756, %v1292
      %v1294 = vand.u32 %v1293, 4294901760
      %1295 = vmatpush.msra.mxu0 %v1294
      %v1296 = vand.u32 %v761, 4294901760
      %1297 = vmatmul.f32.gmra.mxu0 %v1296
      %v1298 = vpop.f32.mrf.mxu0
      %v1299 = vadd.f32 %v1179, %v1298
      %v1300 = vand.u32 %v764, 4294901760
      %1301 = vmatmul.f32.gmra.mxu0 %v1300
      %v1302 = vpop.f32.mrf.mxu0
      %v1303 = vadd.f32 %v1185, %v1302
      %v1304 = vand.u32 %v767, 4294901760
      %1305 = vmatmul.f32.gmra.mxu0 %v1304
      %v1306 = vpop.f32.mrf.mxu0
      %v1307 = vadd.f32 %v1191, %v1306
      %v1308 = vand.u32 %v770, 4294901760
      %1309 = vmatmul.f32.gmra.mxu0 %v1308
      %v1310 = vpop.f32.mrf.mxu0
      %v1311 = vadd.f32 %v1197, %v1310
      %v1312 = vand.u32 %v773, 4294901760
      %1313 = vmatmul.f32.gmra.mxu0 %v1312
      %v1314 = vpop.f32.mrf.mxu0
      %v1315 = vadd.f32 %v1203, %v1314
      %v1316 = vand.u32 %v776, 4294901760
      %1317 = vmatmul.f32.gmra.mxu0 %v1316
      %v1318 = vpop.f32.mrf.mxu0
      %v1319 = vadd.f32 %v1209, %v1318
      %v1320 = vand.u32 %v779, 4294901760
      %1321 = vmatmul.f32.gmra.mxu0 %v1320
      %v1322 = vpop.f32.mrf.mxu0
      %v1323 = vadd.f32 %v1215, %v1322
      %v1324 = vand.u32 %v782, 4294901760
      %1325 = vmatmul.f32.gmra.mxu0 %v1324
      %v1326 = vpop.f32.mrf.mxu0
      %v1327 = vadd.f32 %v1221, %v1326
      %v1328 = vand.u32 %v785, 4294901760
      %1329 = vmatmul.f32.gmra.mxu0 %v1328
      %v1330 = vpop.f32.mrf.mxu0
      %v1331 = vadd.f32 %v1227, %v1330
      %v1332 = vand.u32 %v788, 4294901760
      %1333 = vmatmul.f32.gmra.mxu0 %v1332
      %v1334 = vpop.f32.mrf.mxu0
      %v1335 = vadd.f32 %v1233, %v1334
      %v1336 = vand.u32 %v791, 4294901760
      %1337 = vmatmul.f32.gmra.mxu0 %v1336
      %v1338 = vpop.f32.mrf.mxu0
      %v1339 = vadd.f32 %v1239, %v1338
      %v1340 = vand.u32 %v794, 4294901760
      %1341 = vmatmul.f32.gmra.mxu0 %v1340
      %v1342 = vpop.f32.mrf.mxu0
      %v1343 = vadd.f32 %v1245, %v1342
      %v1344 = vand.u32 %v797, 4294901760
      %1345 = vmatmul.f32.gmra.mxu0 %v1344
      %v1346 = vpop.f32.mrf.mxu0
      %v1347 = vadd.f32 %v1251, %v1346
      %v1348 = vand.u32 %v800, 4294901760
      %1349 = vmatmul.f32.gmra.mxu0 %v1348
      %v1350 = vpop.f32.mrf.mxu0
      %v1351 = vadd.f32 %v1257, %v1350
      %v1352 = vand.u32 %v803, 4294901760
      %1353 = vmatmul.f32.gmra.mxu0 %v1352
      %v1354 = vpop.f32.mrf.mxu0
      %v1355 = vadd.f32 %v1263, %v1354
      %v1356 = vand.u32 %v806, 4294901760
      %1357 = vmatmul.f32.gmra.mxu0 %v1356
      %v1358 = vpop.f32.mrf.mxu0
      %v1359 = vadd.f32 %v1269, %v1358
      %1360 = vdwg.mxu0
      %1361 = vmatpush.msra.mxu0 0.0
      %1362 = vmatpush.msra.mxu0 0.0
      %1363 = vmatpush.msra.mxu0 0.0
      %1364 = vmatpush.msra.mxu0 0.0
      %1365 = vmatpush.msra.mxu0 0.0
      %1366 = vmatpush.msra.mxu0 0.0
      %1367 = vmatpush.msra.mxu0 0.0
      %1368 = vmatpush.msra.mxu0 0.0
      %1369 = vmatpush.msra.mxu0 0.0
      %1370 = vmatpush.msra.mxu0 0.0
      %1371 = vmatpush.msra.mxu0 0.0
      %1372 = vmatpush.msra.mxu0 0.0
      %1373 = vmatpush.msra.mxu0 0.0
      %v1374 = vand.u32 %v758, 4294901760
      %1375 = vmatpush.msra.mxu0 %v1374
      %v1376 = vand.u32 %v757, 4294901760
      %1377 = vmatpush.msra.mxu0 %v1376
      %v1378 = vand.u32 %v756, 4294901760
      %1379 = vmatpush.msra.mxu0 %v1378
      %v1380 = vand.u32 %v761, 4294901760
      %1381 = vmatmul.f32.gmra.mxu0 %v1380
      %v1382 = vpop.f32.mrf.mxu0
      %v1383 = vadd.f32 %v1299, %v1382
      %v1384 = vand.u32 %v764, 4294901760
      %1385 = vmatmul.f32.gmra.mxu0 %v1384
      %v1386 = vpop.f32.mrf.mxu0
      %v1387 = vadd.f32 %v1303, %v1386
      %v1388 = vand.u32 %v767, 4294901760
      %1389 = vmatmul.f32.gmra.mxu0 %v1388
      %v1390 = vpop.f32.mrf.mxu0
      %v1391 = vadd.f32 %v1307, %v1390
      %v1392 = vand.u32 %v770, 4294901760
      %1393 = vmatmul.f32.gmra.mxu0 %v1392
      %v1394 = vpop.f32.mrf.mxu0
      %v1395 = vadd.f32 %v1311, %v1394
      %v1396 = vand.u32 %v773, 4294901760
      %1397 = vmatmul.f32.gmra.mxu0 %v1396
      %v1398 = vpop.f32.mrf.mxu0
      %v1399 = vadd.f32 %v1315, %v1398
      %v1400 = vand.u32 %v776, 4294901760
      %1401 = vmatmul.f32.gmra.mxu0 %v1400
      %v1402 = vpop.f32.mrf.mxu0
      %v1403 = vadd.f32 %v1319, %v1402
      %v1404 = vand.u32 %v779, 4294901760
      %1405 = vmatmul.f32.gmra.mxu0 %v1404
      %v1406 = vpop.f32.mrf.mxu0
      %v1407 = vadd.f32 %v1323, %v1406
      %v1408 = vand.u32 %v782, 4294901760
      %1409 = vmatmul.f32.gmra.mxu0 %v1408
      %v1410 = vpop.f32.mrf.mxu0
      %v1411 = vadd.f32 %v1327, %v1410
      %v1412 = vand.u32 %v785, 4294901760
      %1413 = vmatmul.f32.gmra.mxu0 %v1412
      %v1414 = vpop.f32.mrf.mxu0
      %v1415 = vadd.f32 %v1331, %v1414
      %v1416 = vand.u32 %v788, 4294901760
      %1417 = vmatmul.f32.gmra.mxu0 %v1416
      %v1418 = vpop.f32.mrf.mxu0
      %v1419 = vadd.f32 %v1335, %v1418
      %v1420 = vand.u32 %v791, 4294901760
      %1421 = vmatmul.f32.gmra.mxu0 %v1420
      %v1422 = vpop.f32.mrf.mxu0
      %v1423 = vadd.f32 %v1339, %v1422
      %v1424 = vand.u32 %v794, 4294901760
      %1425 = vmatmul.f32.gmra.mxu0 %v1424
      %v1426 = vpop.f32.mrf.mxu0
      %v1427 = vadd.f32 %v1343, %v1426
      %v1428 = vand.u32 %v797, 4294901760
      %1429 = vmatmul.f32.gmra.mxu0 %v1428
      %v1430 = vpop.f32.mrf.mxu0
      %v1431 = vadd.f32 %v1347, %v1430
      %v1432 = vand.u32 %v800, 4294901760
      %1433 = vmatmul.f32.gmra.mxu0 %v1432
      %v1434 = vpop.f32.mrf.mxu0
      %v1435 = vadd.f32 %v1351, %v1434
      %v1436 = vand.u32 %v803, 4294901760
      %1437 = vmatmul.f32.gmra.mxu0 %v1436
      %v1438 = vpop.f32.mrf.mxu0
      %v1439 = vadd.f32 %v1355, %v1438
      %v1440 = vand.u32 %v806, 4294901760
      %1441 = vmatmul.f32.gmra.mxu0 %v1440
      %v1442 = vpop.f32.mrf.mxu0
      %v1443 = vadd.f32 %v1359, %v1442
      %1444 = vdwg.mxu0
      %v1445 = vmax.f32 %v1383, 1e-08
      %v1446 = vmax.f32 %v1387, 1e-08
      %v1447 = vmax.f32 %v1391, 1e-08
      %v1448 = vmax.f32 %v1395, 1e-08
      %v1449 = vmax.f32 %v1399, 1e-08
      %v1450 = vmax.f32 %v1403, 1e-08
      %v1451 = vmax.f32 %v1407, 1e-08
      %v1452 = vmax.f32 %v1411, 1e-08
      %v1453 = vmax.f32 %v1415, 1e-08
      %v1454 = vmax.f32 %v1419, 1e-08
      %v1455 = vmax.f32 %v1423, 1e-08
      %v1456 = vmax.f32 %v1427, 1e-08
      %v1457 = vmax.f32 %v1431, 1e-08
      %v1458 = vmax.f32 %v1435, 1e-08
      %v1459 = vmax.f32 %v1439, 1e-08
      %v1460 = vmax.f32 %v1443, 1e-08
      %vm1461 = vcmask 64512
      %v1462 = vsel %vm1461, %v1445, 0.0
      %1463 = vadd.xlane.f32.xlu0 %v1462
      %v1464 = vpop.xlane.xlu0 %1463
      %v1465 = vsel %vm1461, %v1446, 0.0
      %1466 = vadd.xlane.f32.xlu0 %v1465
      %v1467 = vpop.xlane.xlu0 %1466
      %v1468 = vsel %vm1461, %v1447, 0.0
      %1469 = vadd.xlane.f32.xlu0 %v1468
      %v1470 = vpop.xlane.xlu0 %1469
      %v1471 = vsel %vm1461, %v1448, 0.0
      %1472 = vadd.xlane.f32.xlu0 %v1471
      %v1473 = vpop.xlane.xlu0 %1472
      %v1474 = vsel %vm1461, %v1449, 0.0
      %1475 = vadd.xlane.f32.xlu0 %v1474
      %v1476 = vpop.xlane.xlu0 %1475
      %v1477 = vsel %vm1461, %v1450, 0.0
      %1478 = vadd.xlane.f32.xlu0 %v1477
      %v1479 = vpop.xlane.xlu0 %1478
      %v1480 = vsel %vm1461, %v1451, 0.0
      %1481 = vadd.xlane.f32.xlu0 %v1480
      %v1482 = vpop.xlane.xlu0 %1481
      %v1483 = vsel %vm1461, %v1452, 0.0
      %1484 = vadd.xlane.f32.xlu0 %v1483
      %v1485 = vpop.xlane.xlu0 %1484
      %v1486 = vsel %vm1461, %v1453, 0.0
      %1487 = vadd.xlane.f32.xlu0 %v1486
      %v1488 = vpop.xlane.xlu0 %1487
      %v1489 = vsel %vm1461, %v1454, 0.0
      %1490 = vadd.xlane.f32.xlu0 %v1489
      %v1491 = vpop.xlane.xlu0 %1490
      %v1492 = vsel %vm1461, %v1455, 0.0
      %1493 = vadd.xlane.f32.xlu0 %v1492
      %v1494 = vpop.xlane.xlu0 %1493
      %v1495 = vsel %vm1461, %v1456, 0.0
      %1496 = vadd.xlane.f32.xlu0 %v1495
      %v1497 = vpop.xlane.xlu0 %1496
      %v1498 = vsel %vm1461, %v1457, 0.0
      %1499 = vadd.xlane.f32.xlu0 %v1498
      %v1500 = vpop.xlane.xlu0 %1499
      %v1501 = vsel %vm1461, %v1458, 0.0
      %1502 = vadd.xlane.f32.xlu0 %v1501
      %v1503 = vpop.xlane.xlu0 %1502
      %v1504 = vsel %vm1461, %v1459, 0.0
      %1505 = vadd.xlane.f32.xlu0 %v1504
      %v1506 = vpop.xlane.xlu0 %1505
      %v1507 = vsel %vm1461, %v1460, 0.0
      %1508 = vadd.xlane.f32.xlu0 %v1507
      %v1509 = vpop.xlane.xlu0 %1508
      %v1510 = vrcp.pop 8.0
      %v1511 = vmul.f32 8.0, %v1510
      %v1512 = vsub.f32 1.0, %v1511
      %v1513 = vmul.f32 %v1510, %v1512
      %v1514 = vadd.f32 %v1510, %v1513
      %vm1515 = vweird.f32 %v1510
      %v1516 = vsel %vm1515, %v1510, %v1514
      %v1517 = vmul.f32 %v1464, %v1516
      %v1518 = vmul.f32 %v1467, %v1516
      %v1519 = vmul.f32 %v1470, %v1516
      %v1520 = vmul.f32 %v1473, %v1516
      %v1521 = vmul.f32 %v1476, %v1516
      %v1522 = vmul.f32 %v1479, %v1516
      %v1523 = vmul.f32 %v1482, %v1516
      %v1524 = vmul.f32 %v1485, %v1516
      %v1525 = vmul.f32 %v1488, %v1516
      %v1526 = vmul.f32 %v1491, %v1516
      %v1527 = vmul.f32 %v1494, %v1516
      %v1528 = vmul.f32 %v1497, %v1516
      %v1529 = vmul.f32 %v1500, %v1516
      %v1530 = vmul.f32 %v1503, %v1516
      %v1531 = vmul.f32 %v1506, %v1516
      %v1532 = vmul.f32 %v1509, %v1516
      %v1533 = vrsqrt.pop %v1517
      %v1534 = vmul.f32 %v1533, %v1517
      %v1535 = vmul.f32 %v1534, %v1533
      %v1536 = vmul.f32 0.5, %v1535
      %v1537 = vsub.f32 1.5, %v1536
      %v1538 = vmul.f32 %v1533, %v1537
      %vm1539 = vweird.f32 %v1517
      %vm1540 = vweird.f32 %v1533
      %vm1541 = vmor %vm1539, %vm1540
      %v1542 = vsel %vm1541, %v1533, %v1538
      %v1543 = vrsqrt.pop %v1518
      %v1544 = vmul.f32 %v1543, %v1518
      %v1545 = vmul.f32 %v1544, %v1543
      %v1546 = vmul.f32 0.5, %v1545
      %v1547 = vsub.f32 1.5, %v1546
      %v1548 = vmul.f32 %v1543, %v1547
      %vm1549 = vweird.f32 %v1518
      %vm1550 = vweird.f32 %v1543
      %vm1551 = vmor %vm1549, %vm1550
      %v1552 = vsel %vm1551, %v1543, %v1548
      %v1553 = vrsqrt.pop %v1519
      %v1554 = vmul.f32 %v1553, %v1519
      %v1555 = vmul.f32 %v1554, %v1553
      %v1556 = vmul.f32 0.5, %v1555
      %v1557 = vsub.f32 1.5, %v1556
      %v1558 = vmul.f32 %v1553, %v1557
      %vm1559 = vweird.f32 %v1519
      %vm1560 = vweird.f32 %v1553
      %vm1561 = vmor %vm1559, %vm1560
      %v1562 = vsel %vm1561, %v1553, %v1558
      %v1563 = vrsqrt.pop %v1520
      %v1564 = vmul.f32 %v1563, %v1520
      %v1565 = vmul.f32 %v1564, %v1563
      %v1566 = vmul.f32 0.5, %v1565
      %v1567 = vsub.f32 1.5, %v1566
      %v1568 = vmul.f32 %v1563, %v1567
      %vm1569 = vweird.f32 %v1520
      %vm1570 = vweird.f32 %v1563
      %vm1571 = vmor %vm1569, %vm1570
      %v1572 = vsel %vm1571, %v1563, %v1568
      %v1573 = vrsqrt.pop %v1521
      %v1574 = vmul.f32 %v1573, %v1521
      %v1575 = vmul.f32 %v1574, %v1573
      %v1576 = vmul.f32 0.5, %v1575
      %v1577 = vsub.f32 1.5, %v1576
      %v1578 = vmul.f32 %v1573, %v1577
      %vm1579 = vweird.f32 %v1521
      %vm1580 = vweird.f32 %v1573
      %vm1581 = vmor %vm1579, %vm1580
      %v1582 = vsel %vm1581, %v1573, %v1578
      %v1583 = vrsqrt.pop %v1522
      %v1584 = vmul.f32 %v1583, %v1522
      %v1585 = vmul.f32 %v1584, %v1583
      %v1586 = vmul.f32 0.5, %v1585
      %v1587 = vsub.f32 1.5, %v1586
      %v1588 = vmul.f32 %v1583, %v1587
      %vm1589 = vweird.f32 %v1522
      %vm1590 = vweird.f32 %v1583
      %vm1591 = vmor %vm1589, %vm1590
      %v1592 = vsel %vm1591, %v1583, %v1588
      %v1593 = vrsqrt.pop %v1523
      %v1594 = vmul.f32 %v1593, %v1523
      %v1595 = vmul.f32 %v1594, %v1593
      %v1596 = vmul.f32 0.5, %v1595
      %v1597 = vsub.f32 1.5, %v1596
      %v1598 = vmul.f32 %v1593, %v1597
      %vm1599 = vweird.f32 %v1523
      %vm1600 = vweird.f32 %v1593
      %vm1601 = vmor %vm1599, %vm1600
      %v1602 = vsel %vm1601, %v1593, %v1598
      %v1603 = vrsqrt.pop %v1524
      %v1604 = vmul.f32 %v1603, %v1524
      %v1605 = vmul.f32 %v1604, %v1603
      %v1606 = vmul.f32 0.5, %v1605
      %v1607 = vsub.f32 1.5, %v1606
      %v1608 = vmul.f32 %v1603, %v1607
      %vm1609 = vweird.f32 %v1524
      %vm1610 = vweird.f32 %v1603
      %vm1611 = vmor %vm1609, %vm1610
      %v1612 = vsel %vm1611, %v1603, %v1608
      %v1613 = vrsqrt.pop %v1525
      %v1614 = vmul.f32 %v1613, %v1525
      %v1615 = vmul.f32 %v1614, %v1613
      %v1616 = vmul.f32 0.5, %v1615
      %v1617 = vsub.f32 1.5, %v1616
      %v1618 = vmul.f32 %v1613, %v1617
      %vm1619 = vweird.f32 %v1525
      %vm1620 = vweird.f32 %v1613
      %vm1621 = vmor %vm1619, %vm1620
      %v1622 = vsel %vm1621, %v1613, %v1618
      %v1623 = vrsqrt.pop %v1526
      %v1624 = vmul.f32 %v1623, %v1526
      %v1625 = vmul.f32 %v1624, %v1623
      %v1626 = vmul.f32 0.5, %v1625
      %v1627 = vsub.f32 1.5, %v1626
      %v1628 = vmul.f32 %v1623, %v1627
      %vm1629 = vweird.f32 %v1526
      %vm1630 = vweird.f32 %v1623
      %vm1631 = vmor %vm1629, %vm1630
      %v1632 = vsel %vm1631, %v1623, %v1628
      %v1633 = vrsqrt.pop %v1527
      %v1634 = vmul.f32 %v1633, %v1527
      %v1635 = vmul.f32 %v1634, %v1633
      %v1636 = vmul.f32 0.5, %v1635
      %v1637 = vsub.f32 1.5, %v1636
      %v1638 = vmul.f32 %v1633, %v1637
      %vm1639 = vweird.f32 %v1527
      %vm1640 = vweird.f32 %v1633
      %vm1641 = vmor %vm1639, %vm1640
      %v1642 = vsel %vm1641, %v1633, %v1638
      %v1643 = vrsqrt.pop %v1528
      %v1644 = vmul.f32 %v1643, %v1528
      %v1645 = vmul.f32 %v1644, %v1643
      %v1646 = vmul.f32 0.5, %v1645
      %v1647 = vsub.f32 1.5, %v1646
      %v1648 = vmul.f32 %v1643, %v1647
      %vm1649 = vweird.f32 %v1528
      %vm1650 = vweird.f32 %v1643
      %vm1651 = vmor %vm1649, %vm1650
      %v1652 = vsel %vm1651, %v1643, %v1648
      %v1653 = vrsqrt.pop %v1529
      %v1654 = vmul.f32 %v1653, %v1529
      %v1655 = vmul.f32 %v1654, %v1653
      %v1656 = vmul.f32 0.5, %v1655
      %v1657 = vsub.f32 1.5, %v1656
      %v1658 = vmul.f32 %v1653, %v1657
      %vm1659 = vweird.f32 %v1529
      %vm1660 = vweird.f32 %v1653
      %vm1661 = vmor %vm1659, %vm1660
      %v1662 = vsel %vm1661, %v1653, %v1658
      %v1663 = vrsqrt.pop %v1530
      %v1664 = vmul.f32 %v1663, %v1530
      %v1665 = vmul.f32 %v1664, %v1663
      %v1666 = vmul.f32 0.5, %v1665
      %v1667 = vsub.f32 1.5, %v1666
      %v1668 = vmul.f32 %v1663, %v1667
      %vm1669 = vweird.f32 %v1530
      %vm1670 = vweird.f32 %v1663
      %vm1671 = vmor %vm1669, %vm1670
      %v1672 = vsel %vm1671, %v1663, %v1668
      %v1673 = vrsqrt.pop %v1531
      %v1674 = vmul.f32 %v1673, %v1531
      %v1675 = vmul.f32 %v1674, %v1673
      %v1676 = vmul.f32 0.5, %v1675
      %v1677 = vsub.f32 1.5, %v1676
      %v1678 = vmul.f32 %v1673, %v1677
      %vm1679 = vweird.f32 %v1531
      %vm1680 = vweird.f32 %v1673
      %vm1681 = vmor %vm1679, %vm1680
      %v1682 = vsel %vm1681, %v1673, %v1678
      %v1683 = vrsqrt.pop %v1532
      %v1684 = vmul.f32 %v1683, %v1532
      %v1685 = vmul.f32 %v1684, %v1683
      %v1686 = vmul.f32 0.5, %v1685
      %v1687 = vsub.f32 1.5, %v1686
      %v1688 = vmul.f32 %v1683, %v1687
      %vm1689 = vweird.f32 %v1532
      %vm1690 = vweird.f32 %v1683
      %vm1691 = vmor %vm1689, %vm1690
      %v1692 = vsel %vm1691, %v1683, %v1688
      %v1693 = vmul.f32 %v724, %v1542
      %v1694 = vmul.f32 %v725, %v1552
      %v1695 = vmul.f32 %v726, %v1562
      %v1696 = vmul.f32 %v727, %v1572
      %v1697 = vmul.f32 %v728, %v1582
      %v1698 = vmul.f32 %v729, %v1592
      %v1699 = vmul.f32 %v730, %v1602
      %v1700 = vmul.f32 %v731, %v1612
      %v1701 = vmul.f32 %v732, %v1622
      %v1702 = vmul.f32 %v733, %v1632
      %v1703 = vmul.f32 %v734, %v1642
      %v1704 = vmul.f32 %v735, %v1652
      %v1705 = vmul.f32 %v736, %v1662
      %v1706 = vmul.f32 %v737, %v1672
      %v1707 = vmul.f32 %v738, %v1682
      %v1708 = vmul.f32 %v739, %v1692
      %1709 = vst.msk [vmem:[%s262] sm:$0xff] %vm759, %v1693
      %1710 = vst.msk [vmem:[%s262 + $0x8] sm:$0xff] %vm759, %v1694
      %1711 = vst.msk [vmem:[%s262 + $0x10] sm:$0xff] %vm759, %v1695
      %1712 = vst.msk [vmem:[%s262 + $0x18] sm:$0xff] %vm759, %v1696
      %1713 = vst.msk [vmem:[%s262 + $0x20] sm:$0xff] %vm759, %v1697
      %1714 = vst.msk [vmem:[%s262 + $0x28] sm:$0xff] %vm759, %v1698
      %1715 = vst.msk [vmem:[%s262 + $0x30] sm:$0xff] %vm759, %v1699
      %1716 = vst.msk [vmem:[%s262 + $0x38] sm:$0xff] %vm759, %v1700
      %1717 = vst.msk [vmem:[%s262 + $0x40] sm:$0xff] %vm759, %v1701
      %1718 = vst.msk [vmem:[%s262 + $0x48] sm:$0xff] %vm759, %v1702
      %1719 = vst.msk [vmem:[%s262 + $0x50] sm:$0xff] %vm759, %v1703
      %1720 = vst.msk [vmem:[%s262 + $0x58] sm:$0xff] %vm759, %v1704
      %1721 = vst.msk [vmem:[%s262 + $0x60] sm:$0xff] %vm759, %v1705
      %1722 = vst.msk [vmem:[%s262 + $0x68] sm:$0xff] %vm759, %v1706
      %1723 = vst.msk [vmem:[%s262 + $0x70] sm:$0xff] %vm759, %v1707
      %1724 = vst.msk [vmem:[%s262 + $0x78] sm:$0xff] %vm759, %v1708
      %s1725 = smul.u32 16, %s17
      %p1726 = scmp.lt.s32.totalorder %s1725, 47
      %s1727 = scalar_select %p1726, %s1725, 47
      %s1728 = smul.addr %s1727, 8
      %s1729 = scalar_lea.vmem %s4, %s1728
      %s1730 = smul.u32 16, %s17
      %p1731 = scmp.lt.s32.totalorder %s1730, 47
      %s1732 = scalar_select %p1731, %s1730, 47
      %s1733 = smul.addr %s1732, 8
      %s1734 = scalar_lea.vmem %s5, %s1733
      // Predicated region
      $region37: #{tpu_custom_call.1} parent=35 // pred_check
        %p1735 = pneg %p129
      $region38: #{tpu_custom_call.1} parent=35 // pred_check_branch
        %1737 = sbr.rel (%p1735) target = $region40
      $region39: #{tpu_custom_call.1} parent=35 // pred_region
        %s1738 = smul.u32 16, %s17
      $region40: #{tpu_custom_call.1} parent=35 // pred_fallthru
        _
      // Predicated region
      $region41: #{tpu_custom_call.1} parent=35 // pred_check
        %p1739 = pneg %p155
      $region42: #{tpu_custom_call.1} parent=35 // pred_check_branch
        %1741 = sbr.rel (%p1739) target = $region44
      $region43: #{tpu_custom_call.1} parent=35 // pred_region
        %s1742 = smul.u32 16, %s17
      $region44: #{tpu_custom_call.1} parent=35 // pred_fallthru
        _
    $region36: #{tpu_custom_call.1} parent=5 // pred_fallthru
      _
    %p1743 = scmp.le.s32.totalorder 2, %s12
    // Predicated region
    $region45: #{tpu_custom_call.1} parent=5 // pred_check
      %p1744 = pneg %p1743
    $region46: #{tpu_custom_call.1} parent=5 // pred_check_branch
      %1746 = sbr.rel (%p1744) target = $region48
    $region47: #{tpu_custom_call.1} parent=5 // pred_region
      %s1747 = ssub.s32 %s12, 2
      // Predicated region
      $region49: #{tpu_custom_call.1} parent=47 // pred_check
        %p1748 = pneg %p135
      $region50: #{tpu_custom_call.1} parent=47 // pred_check_branch
        %1750 = sbr.rel (%p1748) target = $region52
      $region51: #{tpu_custom_call.1} parent=47 // pred_region
        %s1751 = smul.u32 16, %s18
        %p1752 = scmp.lt.s32.totalorder %s1751, 47
        %s1753 = scalar_select %p1752, %s1751, 47
        %s1754 = smul.addr %s1753, 8
        %s1755 = scalar_lea.vmem %s4, %s1754
      $region52: #{tpu_custom_call.1} parent=47 // pred_fallthru
        _
      // Predicated region
      $region53: #{tpu_custom_call.1} parent=47 // pred_check
        %p1756 = pneg %p161
      $region54: #{tpu_custom_call.1} parent=47 // pred_check_branch
        %1758 = sbr.rel (%p1756) target = $region56
      $region55: #{tpu_custom_call.1} parent=47 // pred_region
        %s1759 = smul.u32 16, %s18
        %p1760 = scmp.lt.s32.totalorder %s1759, 47
        %s1761 = scalar_select %p1760, %s1759, 47
        %s1762 = smul.addr %s1761, 8
        %s1763 = scalar_lea.vmem %s5, %s1762
      $region56: #{tpu_custom_call.1} parent=47 // pred_fallthru
        _
    $region48: #{tpu_custom_call.1} parent=5 // pred_fallthru
      _
  $region6: #{tpu_custom_call.1} parent=0 // loop_footer
    %s16 = sadd.s32 1, %s12
  $region7: #{tpu_custom_call.1} parent=0 // loop_footer_branch
    %11 = sbr.rel target = $region3
  $region8: #{tpu_custom_call.1} parent=0 // loop_exit
    _

</llo_original>
